<compile_context>
chip_gen: v7x
topology: tpu7x:2x2x1
jax: 0.10.0
libtpu: 0.0.40
codegen_flags: <defaults>
</compile_context>

<pallas_src>
import functools
import math

import jax
import jax.numpy as jnp
from jax.experimental import pallas as pl
from jax.experimental.pallas import tpu as pltpu


def _layer_norm(x, gamma, beta, eps=1e-5):
    # PyTorch nn.LayerNorm over last dim (biased variance, eps=1e-5); f32 throughout.
    mu = jnp.mean(x, axis=-1, keepdims=True)
    var = jnp.mean((x - mu) ** 2, axis=-1, keepdims=True)
    return (x - mu) * jax.lax.rsqrt(var + eps) * gamma + beta


def encoder_layer_kernel(
    n_heads, q_tile,
    x_ref,
    wqkv_ref, bqkv_ref, wo_ref, bo_ref,
    w1_ref, b1_ref, w2_ref, b2_ref,
    g1_ref, be1_ref, g2_ref, be2_ref,
    out_ref, score_ref,
    qkv_ref, ctx_ref,
):
    qi = pl.program_id(1)
    _, S, D = x_ref.shape
    dh = D // n_heads
    cdt = qkv_ref.dtype  # matmul operand dtype (bfloat16)

    # ---- Fused Q/K/V projection: once per batch element, kept resident in VMEM scratch.
    # (1/sqrt(dh) is already folded into the Q columns of wqkv/bqkv host-side.)
    @pl.when(qi == 0)
    def _():
        xf = x_ref[0].astype(cdt)                                       # (S, D)
        qkv = jnp.dot(xf, wqkv_ref[...],
                      preferred_element_type=jnp.float32) + bqkv_ref[0]  # (S, 3D) f32
        qkv_ref[...] = qkv.astype(cdt)

    row0 = pl.multiple_of(qi * q_tile, q_tile)
    x_q = x_ref[0, pl.ds(row0, q_tile), :]                 # (TQ, D) f32 residual input
    q = qkv_ref[pl.ds(row0, q_tile), 0:D]                  # (TQ, D) bf16 (pre-scaled)
    k = qkv_ref[:, D:2 * D]                                # (S, D)  bf16
    v = qkv_ref[:, 2 * D:3 * D]                            # (S, D)  bf16

    # ---- Per-head attention (mask = None).  Static unroll over the small head count;
    # logits use dot_general (contract dim 1 of both operands -> no XLU transpose) and
    # contexts are packed into ctx_ref at static column offsets (no concatenate).
    # TODO(synk): for small d_head, pack heads so the MXU contraction width reaches 128+.
    for h in range(n_heads):
        cols = slice(h * dh, (h + 1) * dh)
        s = jax.lax.dot_general(q[:, cols], k[:, cols],
                                (((1,), (1,)), ((), ())),
                                preferred_element_type=jnp.float32)      # (TQ, S) f32
        m = jnp.max(s, axis=-1, keepdims=True)
        e = jnp.exp(s - m)
        p = e * pl.reciprocal(jnp.sum(e, axis=-1, keepdims=True), approx=True)
        score_ref[0, h, :, :] = p.astype(score_ref.dtype)
        ctx_ref[:, cols] = jnp.dot(p.astype(cdt), v[:, cols],
                                   preferred_element_type=jnp.float32).astype(cdt)

    attn = jnp.dot(ctx_ref[...], wo_ref[...],
                   preferred_element_type=jnp.float32) + bo_ref[0]       # (TQ, D) f32

    # dropout1 == identity (eval);  norm1(inputs + attention) in f32
    a = _layer_norm(x_q + attn, g1_ref[0], be1_ref[0])

    # ---- Position-wise feed-forward: Linear -> ReLU -> Linear (bf16 operands, f32 acc)
    h1 = jnp.dot(a.astype(cdt), w1_ref[...],
                 preferred_element_type=jnp.float32) + b1_ref[0]
    h1 = jnp.maximum(h1, 0.0)
    ff = jnp.dot(h1.astype(cdt), w2_ref[...],
                 preferred_element_type=jnp.float32) + b2_ref[0]

    # dropout2 == identity (eval);  norm2(attention + outputs) in f32
    out = _layer_norm(a + ff, g2_ref[0], be2_ref[0])
    out_ref[0] = out.astype(out_ref.dtype)


def encoder_layer(x, params, n_heads, *, q_tile=None,
                  compute_dtype=jnp.bfloat16, score_dtype=jnp.float32):
    B, S, D = x.shape
    Hff = params["w1"].shape[1]
    H = n_heads
    assert D % H == 0
    dh = D // H
    scale = 1.0 / math.sqrt(dh)

    if q_tile is None:
        q_tile = min(S, 128)
    assert S % q_tile == 0
    n_q = S // q_tile

    cdt = compute_dtype
    # Host-side: fuse Q/K/V weights into one (D, 3D) matrix, fold the attention scale
    # into the Q columns, and cast weights to the matmul operand dtype (halves DMA bytes).
    wqkv = jnp.concatenate(
        [params["wq"] * scale, params["wk"], params["wv"]], axis=1).astype(cdt)
    bqkv = jnp.concatenate(
        [params["bq"] * scale, params["bk"], params["bv"]], axis=1)          # f32
    wo = params["wo"].astype(cdt)
    w1 = params["w1"].astype(cdt)
    w2 = params["w2"].astype(cdt)

    # Weights / biases: constant index_maps -> resident across the whole grid.
    full2d = lambda shape: pl.BlockSpec(shape, lambda b, qi: (0, 0))
    in_specs = [
        pl.BlockSpec((1, S, D), lambda b, qi: (b, 0, 0)),   # x (full sequence, f32)
        full2d((D, 3 * D)), full2d((1, 3 * D)),             # Wqkv, bqkv (scale folded in)
        full2d((D, D)), full2d((1, D)),                     # Wo, bo
        full2d((D, Hff)), full2d((1, Hff)),                 # W1, b1
        full2d((Hff, D)), full2d((1, D)),                   # W2, b2
        full2d((1, D)), full2d((1, D)),                     # gamma1, beta1
        full2d((1, D)), full2d((1, D)),                     # gamma2, beta2
    ]
    out_specs = (
        pl.BlockSpec((1, q_tile, D), lambda b, qi: (b, qi, 0)),
        pl.BlockSpec((1, H, q_tile, S), lambda b, qi: (b, 0, qi, 0)),
    )
    out_shape = (
        jax.ShapeDtypeStruct((B, S, D), x.dtype),
        jax.ShapeDtypeStruct((B, H, S, S), score_dtype),
    )

    kernel = functools.partial(encoder_layer_kernel, H, q_tile)
    return pl.pallas_call(
        kernel,
        out_shape=out_shape,
        grid_spec=pltpu.PrefetchScalarGridSpec(
            num_scalar_prefetch=0,
            grid=(B, n_q),
            in_specs=in_specs,
            out_specs=out_specs,
            scratch_shapes=[
                # Fused q|k|v projections, persistent across the query-tile axis.
                pltpu.VMEM((S, 3 * D), cdt),
                # Per-tile attention context, heads packed along columns.
                pltpu.VMEM((q_tile, D), cdt),
            ],
        ),
        compiler_params=pltpu.CompilerParams(
            # q-tile axis is 'arbitrary': it reuses the VMEM-resident qkv scratch
            # computed at qi == 0 for each batch element.
            dimension_semantics=("parallel", "arbitrary"),
            vmem_limit_bytes=48 * 1024 * 1024,
        ),
    )(
        x, wqkv, bqkv, wo, params["bo"], w1, params["b1"], w2, params["b2"],
        params["g1"], params["be1"], params["g2"], params["be2"],
    )


def init_params(key, d_model, n_heads, hidden):
    ks = jax.random.split(key, 8)
    s = 0.02
    f32 = jnp.float32
    return {
        "wq": s * jax.random.normal(ks[0], (d_model, d_model), f32),
        "bq": jnp.zeros((1, d_model), f32),
        "wk": s * jax.random.normal(ks[1], (d_model, d_model), f32),
        "bk": jnp.zeros((1, d_model), f32),
        "wv": s * jax.random.normal(ks[2], (d_model, d_model), f32),
        "bv": jnp.zeros((1, d_model), f32),
        "wo": s * jax.random.normal(ks[3], (d_model, d_model), f32),
        "bo": jnp.zeros((1, d_model), f32),
        "w1": s * jax.random.normal(ks[4], (d_model, hidden), f32),
        "b1": jnp.zeros((1, hidden), f32),
        "w2": s * jax.random.normal(ks[5], (hidden, d_model), f32),
        "b2": jnp.zeros((1, d_model), f32),
        "g1": jnp.ones((1, d_model), f32),
        "be1": jnp.zeros((1, d_model), f32),
        "g2": jnp.ones((1, d_model), f32),
        "be2": jnp.zeros((1, d_model), f32),
    }


def _reference(x, p, n_heads):
    # pure-JAX f32 reference for sanity checking
    B, S, D = x.shape
    dh = D // n_heads
    q = x @ p["wq"] + p["bq"][0]
    k = x @ p["wk"] + p["bk"][0]
    v = x @ p["wv"] + p["bv"][0]
    q = q.reshape(B, S, n_heads, dh).transpose(0, 2, 1, 3)
    k = k.reshape(B, S, n_heads, dh).transpose(0, 2, 1, 3)
    v = v.reshape(B, S, n_heads, dh).transpose(0, 2, 1, 3)
    s = jnp.einsum("bhqd,bhkd->bhqk", q, k) / math.sqrt(dh)
    prob = jax.nn.softmax(s, axis=-1)
    ctx = jnp.einsum("bhqk,bhkd->bhqd", prob, v).transpose(0, 2, 1, 3).reshape(B, S, D)
    attn = ctx @ p["wo"] + p["bo"][0]

    def ln(z, g, b):
        mu = z.mean(-1, keepdims=True)
        var = ((z - mu) ** 2).mean(-1, keepdims=True)
        return (z - mu) / jnp.sqrt(var + 1e-5) * g + b

    a = ln(x + attn, p["g1"][0], p["be1"][0])
    ff = jnp.maximum(a @ p["w1"] + p["b1"][0], 0.0) @ p["w2"] + p["b2"][0]
    out = ln(a + ff, p["g2"][0], p["be2"][0])
    return out, prob


if __name__ == "__main__":
    B, S, d_model, n_heads, hidden = 2, 8, 32, 4, 64
    key = jax.random.PRNGKey(0)
    kx, kp = jax.random.split(key)
    x = jax.random.normal(kx, (B, S, d_model), jnp.float32)
    params = init_params(kp, d_model, n_heads, hidden)

    out, score = encoder_layer(x, params, n_heads)
    out = jax.block_until_ready(out)
    score = jax.block_until_ready(score)

    ref_out, ref_score = _reference(x, params, n_heads)
    # bf16 matmul operands + approx reciprocal -> tolerance looser than pure-f32.
    assert jnp.allclose(out, ref_out, atol=2e-2, rtol=2e-2), "output mismatch"
    assert jnp.allclose(score, ref_score, atol=2e-2, rtol=2e-2), "score mismatch"
    print("KERNEL_OK")
</pallas_src>

<mosaic_0001>
module attributes {stable_mosaic.version = 11 : i64} {
  func.func @encoder_layer_kernel(%arg0: i32, %arg1: i32, %arg2: memref<1x8x32xf32, #tpu.memory_space<vmem>>, %arg3: memref<32x96xbf16, #tpu.memory_space<vmem>>, %arg4: memref<1x96xf32, #tpu.memory_space<vmem>>, %arg5: memref<32x32xbf16, #tpu.memory_space<vmem>>, %arg6: memref<1x32xf32, #tpu.memory_space<vmem>>, %arg7: memref<32x64xbf16, #tpu.memory_space<vmem>>, %arg8: memref<1x64xf32, #tpu.memory_space<vmem>>, %arg9: memref<64x32xbf16, #tpu.memory_space<vmem>>, %arg10: memref<1x32xf32, #tpu.memory_space<vmem>>, %arg11: memref<1x32xf32, #tpu.memory_space<vmem>>, %arg12: memref<1x32xf32, #tpu.memory_space<vmem>>, %arg13: memref<1x32xf32, #tpu.memory_space<vmem>>, %arg14: memref<1x32xf32, #tpu.memory_space<vmem>>, %arg15: memref<1x8x32xf32, #tpu.memory_space<vmem>>, %arg16: memref<1x4x8x8xf32, #tpu.memory_space<vmem>>, %arg17: memref<8x96xbf16, #tpu.memory_space<vmem>>, %arg18: memref<8x32xbf16, #tpu.memory_space<vmem>>) attributes {dimension_semantics = [#tpu.dimension_semantics<parallel>, #tpu.dimension_semantics<arbitrary>], iteration_bounds = array<i64: 2, 1>, scalar_prefetch = 0 : i64, scratch_operands = 2 : i64, tpu.core_type = #tpu.core_type<tc>, window_params = [{transform_indices = @transform_0, window_bounds = array<i64: 1, 8, 32>}, {pipeline_mode = #tpu.pipeline_mode<synchronous>, transform_indices = @transform_1, window_bounds = array<i64: 32, 96>}, {pipeline_mode = #tpu.pipeline_mode<synchronous>, transform_indices = @transform_2, window_bounds = array<i64: 1, 96>}, {pipeline_mode = #tpu.pipeline_mode<synchronous>, transform_indices = @transform_3, window_bounds = array<i64: 32, 32>}, {pipeline_mode = #tpu.pipeline_mode<synchronous>, transform_indices = @transform_4, window_bounds = array<i64: 1, 32>}, {pipeline_mode = #tpu.pipeline_mode<synchronous>, transform_indices = @transform_5, window_bounds = array<i64: 32, 64>}, {pipeline_mode = #tpu.pipeline_mode<synchronous>, transform_indices = @transform_6, window_bounds = array<i64: 1, 64>}, {pipeline_mode = #tpu.pipeline_mode<synchronous>, transform_indices = @transform_7, window_bounds = array<i64: 64, 32>}, {pipeline_mode = #tpu.pipeline_mode<synchronous>, transform_indices = @transform_8, window_bounds = array<i64: 1, 32>}, {pipeline_mode = #tpu.pipeline_mode<synchronous>, transform_indices = @transform_9, window_bounds = array<i64: 1, 32>}, {pipeline_mode = #tpu.pipeline_mode<synchronous>, transform_indices = @transform_10, window_bounds = array<i64: 1, 32>}, {pipeline_mode = #tpu.pipeline_mode<synchronous>, transform_indices = @transform_11, window_bounds = array<i64: 1, 32>}, {pipeline_mode = #tpu.pipeline_mode<synchronous>, transform_indices = @transform_12, window_bounds = array<i64: 1, 32>}, {transform_indices = @transform_13, window_bounds = array<i64: 1, 8, 32>}, {transform_indices = @transform_14, window_bounds = array<i64: 1, 4, 8, 8>}]} {
    %c0_i32 = arith.constant 0 : i32
    %0 = arith.cmpi eq, %arg1, %c0_i32 : i32
    %1 = arith.extui %0 : i1 to i32
    %c0_i32_0 = arith.constant 0 : i32
    %2 = arith.cmpi ne, %1, %c0_i32_0 : i32
    scf.if %2 {
      %c0_77 = arith.constant 0 : index
      %c0_78 = arith.constant 0 : index
      %c0_79 = arith.constant 0 : index
      %183 = vector.load %arg2[%c0_77, %c0_78, %c0_79] : memref<1x8x32xf32, #tpu.memory_space<vmem>>, vector<1x8x32xf32>
      %184 = vector.shape_cast %183 : vector<1x8x32xf32> to vector<8x32xf32>
      %185 = arith.truncf %184 : vector<8x32xf32> to vector<8x32xbf16>
      %c0_80 = arith.constant 0 : index
      %c0_81 = arith.constant 0 : index
      %186 = vector.load %arg3[%c0_80, %c0_81] : memref<32x96xbf16, #tpu.memory_space<vmem>>, vector<32x96xbf16>
      %cst_82 = arith.constant dense<0.000000e+00> : vector<8x96xf32>
      %187 = tpu.matmul %185, %186, %cst_82 {dimension_numbers = #tpu.dot_dimension_numbers<[1], [0], [0], [1], [0, 0, 1, 1], [], []>} : vector<8x32xbf16>, vector<32x96xbf16>, vector<8x96xf32> -> vector<8x96xf32>
      %c0_83 = arith.constant 0 : index
      %c0_84 = arith.constant 0 : index
      %188 = vector.load %arg4[%c0_83, %c0_84] : memref<1x96xf32, #tpu.memory_space<vmem>>, vector<1x96xf32>
      %189 = vector.shape_cast %188 : vector<1x96xf32> to vector<96xf32>
      %190 = vector.shape_cast %189 : vector<96xf32> to vector<1x96xf32>
      %191 = vector.broadcast %190 : vector<1x96xf32> to vector<8x96xf32>
      %192 = arith.addf %187, %191 : vector<8x96xf32>
      %193 = arith.truncf %192 : vector<8x96xf32> to vector<8x96xbf16>
      %c0_85 = arith.constant 0 : index
      %c0_86 = arith.constant 0 : index
      %194 = vector.load %arg17[%c0_85, %c0_86] : memref<8x96xbf16, #tpu.memory_space<vmem>>, vector<8x96xbf16>
      tpu.vector_store %arg17[%c0_85, %c0_86], %193 {strides = array<i32>} : memref<8x96xbf16, #tpu.memory_space<vmem>>, vector<8x96xbf16>,
    } else {
    }
    %c8_i32 = arith.constant 8 : i32
    %3 = arith.muli %arg1, %c8_i32 : i32
    %4 = tpu.assume_multiple %3, 8 : i32
    %c0 = arith.constant 0 : index
    %5 = arith.index_cast %4 : i32 to index
    %c0_1 = arith.constant 0 : index
    %6 = vector.load %arg2[%c0, %5, %c0_1] : memref<1x8x32xf32, #tpu.memory_space<vmem>>, vector<1x8x32xf32>
    %7 = vector.shape_cast %6 : vector<1x8x32xf32> to vector<8x32xf32>
    %8 = arith.index_cast %4 : i32 to index
    %c0_2 = arith.constant 0 : index
    %9 = vector.load %arg17[%8, %c0_2] : memref<8x96xbf16, #tpu.memory_space<vmem>>, vector<8x32xbf16>
    %c0_3 = arith.constant 0 : index
    %c32 = arith.constant 32 : index
    %10 = vector.load %arg17[%c0_3, %c32] : memref<8x96xbf16, #tpu.memory_space<vmem>>, vector<8x32xbf16>
    %c0_4 = arith.constant 0 : index
    %c64 = arith.constant 64 : index
    %11 = vector.load %arg17[%c0_4, %c64] : memref<8x96xbf16, #tpu.memory_space<vmem>>, vector<8x32xbf16>
    %12 = vector.extract_strided_slice %9 {offsets = [0, 0], sizes = [8, 8], strides = [1, 1]} : vector<8x32xbf16> to vector<8x8xbf16>
    %13 = vector.extract_strided_slice %10 {offsets = [0, 0], sizes = [8, 8], strides = [1, 1]} : vector<8x32xbf16> to vector<8x8xbf16>
    %cst = arith.constant dense<0.000000e+00> : vector<8x8xf32>
    %14 = tpu.matmul %12, %13, %cst {dimension_numbers = #tpu.dot_dimension_numbers<[1], [1], [0], [0], [0, 0, 1, 0], [], []>} : vector<8x8xbf16>, vector<8x8xbf16>, vector<8x8xf32> -> vector<8x8xf32>
    %cst_5 = arith.constant dense<0xFF800000> : vector<8xf32>
    %15 = vector.multi_reduction <maximumf>, %14, %cst_5 [1] : vector<8x8xf32> to vector<8xf32>
    %16 = vector.shape_cast %15 : vector<8xf32> to vector<8x1xf32>
    %17 = vector.broadcast %16 : vector<8x1xf32> to vector<8x8xf32>
    %18 = arith.subf %14, %17 : vector<8x8xf32>
    %19 = math.exp %18 : vector<8x8xf32>
    %cst_6 = arith.constant dense<0.000000e+00> : vector<8xf32>
    %20 = vector.multi_reduction <add>, %19, %cst_6 [1] : vector<8x8xf32> to vector<8xf32>
    %21 = vector.shape_cast %20 : vector<8xf32> to vector<8x1xf32>
    %22 = tpu.reciprocal %21 {approx = true} : vector<8x1xf32> -> vector<8x1xf32>
    %23 = vector.broadcast %22 : vector<8x1xf32> to vector<8x8xf32>
    %24 = arith.mulf %19, %23 : vector<8x8xf32>
    %c0_7 = arith.constant 0 : index
    %c0_8 = arith.constant 0 : index
    %c0_9 = arith.constant 0 : index
    %c0_10 = arith.constant 0 : index
    %25 = vector.load %arg16[%c0_7, %c0_8, %c0_9, %c0_10] : memref<1x4x8x8xf32, #tpu.memory_space<vmem>>, vector<1x1x8x8xf32>
    %26 = vector.shape_cast %25 : vector<1x1x8x8xf32> to vector<8x8xf32>
    %27 = vector.shape_cast %24 : vector<8x8xf32> to vector<1x1x8x8xf32>
    tpu.vector_store %arg16[%c0_7, %c0_8, %c0_9, %c0_10], %27 {strides = array<i32>} : memref<1x4x8x8xf32, #tpu.memory_space<vmem>>, vector<1x1x8x8xf32>,
    %28 = arith.truncf %24 : vector<8x8xf32> to vector<8x8xbf16>
    %29 = vector.extract_strided_slice %11 {offsets = [0, 0], sizes = [8, 8], strides = [1, 1]} : vector<8x32xbf16> to vector<8x8xbf16>
    %cst_11 = arith.constant dense<0.000000e+00> : vector<8x8xf32>
    %30 = tpu.matmul %28, %29, %cst_11 {dimension_numbers = #tpu.dot_dimension_numbers<[1], [0], [0], [1], [0, 0, 1, 1], [], []>} : vector<8x8xbf16>, vector<8x8xbf16>, vector<8x8xf32> -> vector<8x8xf32>
    %31 = arith.truncf %30 : vector<8x8xf32> to vector<8x8xbf16>
    %c0_12 = arith.constant 0 : index
    %c0_13 = arith.constant 0 : index
    %32 = vector.load %arg18[%c0_12, %c0_13] : memref<8x32xbf16, #tpu.memory_space<vmem>>, vector<8x8xbf16>
    tpu.vector_store %arg18[%c0_12, %c0_13], %31 {strides = array<i32>} : memref<8x32xbf16, #tpu.memory_space<vmem>>, vector<8x8xbf16>,
    %33 = vector.extract_strided_slice %9 {offsets = [0, 8], sizes = [8, 8], strides = [1, 1]} : vector<8x32xbf16> to vector<8x8xbf16>
    %34 = vector.extract_strided_slice %10 {offsets = [0, 8], sizes = [8, 8], strides = [1, 1]} : vector<8x32xbf16> to vector<8x8xbf16>
    %cst_14 = arith.constant dense<0.000000e+00> : vector<8x8xf32>
    %35 = tpu.matmul %33, %34, %cst_14 {dimension_numbers = #tpu.dot_dimension_numbers<[1], [1], [0], [0], [0, 0, 1, 0], [], []>} : vector<8x8xbf16>, vector<8x8xbf16>, vector<8x8xf32> -> vector<8x8xf32>
    %cst_15 = arith.constant dense<0xFF800000> : vector<8xf32>
    %36 = vector.multi_reduction <maximumf>, %35, %cst_15 [1] : vector<8x8xf32> to vector<8xf32>
    %37 = vector.shape_cast %36 : vector<8xf32> to vector<8x1xf32>
    %38 = vector.broadcast %37 : vector<8x1xf32> to vector<8x8xf32>
    %39 = arith.subf %35, %38 : vector<8x8xf32>
    %40 = math.exp %39 : vector<8x8xf32>
    %cst_16 = arith.constant dense<0.000000e+00> : vector<8xf32>
    %41 = vector.multi_reduction <add>, %40, %cst_16 [1] : vector<8x8xf32> to vector<8xf32>
    %42 = vector.shape_cast %41 : vector<8xf32> to vector<8x1xf32>
    %43 = tpu.reciprocal %42 {approx = true} : vector<8x1xf32> -> vector<8x1xf32>
    %44 = vector.broadcast %43 : vector<8x1xf32> to vector<8x8xf32>
    %45 = arith.mulf %40, %44 : vector<8x8xf32>
    %c0_17 = arith.constant 0 : index
    %c1 = arith.constant 1 : index
    %c0_18 = arith.constant 0 : index
    %c0_19 = arith.constant 0 : index
    %46 = vector.load %arg16[%c0_17, %c1, %c0_18, %c0_19] : memref<1x4x8x8xf32, #tpu.memory_space<vmem>>, vector<1x1x8x8xf32>
    %47 = vector.shape_cast %46 : vector<1x1x8x8xf32> to vector<8x8xf32>
    %48 = vector.shape_cast %45 : vector<8x8xf32> to vector<1x1x8x8xf32>
    tpu.vector_store %arg16[%c0_17, %c1, %c0_18, %c0_19], %48 {strides = array<i32>} : memref<1x4x8x8xf32, #tpu.memory_space<vmem>>, vector<1x1x8x8xf32>,
    %49 = arith.truncf %45 : vector<8x8xf32> to vector<8x8xbf16>
    %50 = vector.extract_strided_slice %11 {offsets = [0, 8], sizes = [8, 8], strides = [1, 1]} : vector<8x32xbf16> to vector<8x8xbf16>
    %cst_20 = arith.constant dense<0.000000e+00> : vector<8x8xf32>
    %51 = tpu.matmul %49, %50, %cst_20 {dimension_numbers = #tpu.dot_dimension_numbers<[1], [0], [0], [1], [0, 0, 1, 1], [], []>} : vector<8x8xbf16>, vector<8x8xbf16>, vector<8x8xf32> -> vector<8x8xf32>
    %52 = arith.truncf %51 : vector<8x8xf32> to vector<8x8xbf16>
    %c0_21 = arith.constant 0 : index
    %c8 = arith.constant 8 : index
    %53 = vector.load %arg18[%c0_21, %c8] : memref<8x32xbf16, #tpu.memory_space<vmem>>, vector<8x8xbf16>
    tpu.vector_store %arg18[%c0_21, %c8], %52 {strides = array<i32>} : memref<8x32xbf16, #tpu.memory_space<vmem>>, vector<8x8xbf16>,
    %54 = vector.extract_strided_slice %9 {offsets = [0, 16], sizes = [8, 8], strides = [1, 1]} : vector<8x32xbf16> to vector<8x8xbf16>
    %55 = vector.extract_strided_slice %10 {offsets = [0, 16], sizes = [8, 8], strides = [1, 1]} : vector<8x32xbf16> to vector<8x8xbf16>
    %cst_22 = arith.constant dense<0.000000e+00> : vector<8x8xf32>
    %56 = tpu.matmul %54, %55, %cst_22 {dimension_numbers = #tpu.dot_dimension_numbers<[1], [1], [0], [0], [0, 0, 1, 0], [], []>} : vector<8x8xbf16>, vector<8x8xbf16>, vector<8x8xf32> -> vector<8x8xf32>
    %cst_23 = arith.constant dense<0xFF800000> : vector<8xf32>
    %57 = vector.multi_reduction <maximumf>, %56, %cst_23 [1] : vector<8x8xf32> to vector<8xf32>
    %58 = vector.shape_cast %57 : vector<8xf32> to vector<8x1xf32>
    %59 = vector.broadcast %58 : vector<8x1xf32> to vector<8x8xf32>
    %60 = arith.subf %56, %59 : vector<8x8xf32>
    %61 = math.exp %60 : vector<8x8xf32>
    %cst_24 = arith.constant dense<0.000000e+00> : vector<8xf32>
    %62 = vector.multi_reduction <add>, %61, %cst_24 [1] : vector<8x8xf32> to vector<8xf32>
    %63 = vector.shape_cast %62 : vector<8xf32> to vector<8x1xf32>
    %64 = tpu.reciprocal %63 {approx = true} : vector<8x1xf32> -> vector<8x1xf32>
    %65 = vector.broadcast %64 : vector<8x1xf32> to vector<8x8xf32>
    %66 = arith.mulf %61, %65 : vector<8x8xf32>
    %c0_25 = arith.constant 0 : index
    %c2 = arith.constant 2 : index
    %c0_26 = arith.constant 0 : index
    %c0_27 = arith.constant 0 : index
    %67 = vector.load %arg16[%c0_25, %c2, %c0_26, %c0_27] : memref<1x4x8x8xf32, #tpu.memory_space<vmem>>, vector<1x1x8x8xf32>
    %68 = vector.shape_cast %67 : vector<1x1x8x8xf32> to vector<8x8xf32>
    %69 = vector.shape_cast %66 : vector<8x8xf32> to vector<1x1x8x8xf32>
    tpu.vector_store %arg16[%c0_25, %c2, %c0_26, %c0_27], %69 {strides = array<i32>} : memref<1x4x8x8xf32, #tpu.memory_space<vmem>>, vector<1x1x8x8xf32>,
    %70 = arith.truncf %66 : vector<8x8xf32> to vector<8x8xbf16>
    %71 = vector.extract_strided_slice %11 {offsets = [0, 16], sizes = [8, 8], strides = [1, 1]} : vector<8x32xbf16> to vector<8x8xbf16>
    %cst_28 = arith.constant dense<0.000000e+00> : vector<8x8xf32>
    %72 = tpu.matmul %70, %71, %cst_28 {dimension_numbers = #tpu.dot_dimension_numbers<[1], [0], [0], [1], [0, 0, 1, 1], [], []>} : vector<8x8xbf16>, vector<8x8xbf16>, vector<8x8xf32> -> vector<8x8xf32>
    %73 = arith.truncf %72 : vector<8x8xf32> to vector<8x8xbf16>
    %c0_29 = arith.constant 0 : index
    %c16 = arith.constant 16 : index
    %74 = vector.load %arg18[%c0_29, %c16] : memref<8x32xbf16, #tpu.memory_space<vmem>>, vector<8x8xbf16>
    tpu.vector_store %arg18[%c0_29, %c16], %73 {strides = array<i32>} : memref<8x32xbf16, #tpu.memory_space<vmem>>, vector<8x8xbf16>,
    %75 = vector.extract_strided_slice %9 {offsets = [0, 24], sizes = [8, 8], strides = [1, 1]} : vector<8x32xbf16> to vector<8x8xbf16>
    %76 = vector.extract_strided_slice %10 {offsets = [0, 24], sizes = [8, 8], strides = [1, 1]} : vector<8x32xbf16> to vector<8x8xbf16>
    %cst_30 = arith.constant dense<0.000000e+00> : vector<8x8xf32>
    %77 = tpu.matmul %75, %76, %cst_30 {dimension_numbers = #tpu.dot_dimension_numbers<[1], [1], [0], [0], [0, 0, 1, 0], [], []>} : vector<8x8xbf16>, vector<8x8xbf16>, vector<8x8xf32> -> vector<8x8xf32>
    %cst_31 = arith.constant dense<0xFF800000> : vector<8xf32>
    %78 = vector.multi_reduction <maximumf>, %77, %cst_31 [1] : vector<8x8xf32> to vector<8xf32>
    %79 = vector.shape_cast %78 : vector<8xf32> to vector<8x1xf32>
    %80 = vector.broadcast %79 : vector<8x1xf32> to vector<8x8xf32>
    %81 = arith.subf %77, %80 : vector<8x8xf32>
    %82 = math.exp %81 : vector<8x8xf32>
    %cst_32 = arith.constant dense<0.000000e+00> : vector<8xf32>
    %83 = vector.multi_reduction <add>, %82, %cst_32 [1] : vector<8x8xf32> to vector<8xf32>
    %84 = vector.shape_cast %83 : vector<8xf32> to vector<8x1xf32>
    %85 = tpu.reciprocal %84 {approx = true} : vector<8x1xf32> -> vector<8x1xf32>
    %86 = vector.broadcast %85 : vector<8x1xf32> to vector<8x8xf32>
    %87 = arith.mulf %82, %86 : vector<8x8xf32>
    %c0_33 = arith.constant 0 : index
    %c3 = arith.constant 3 : index
    %c0_34 = arith.constant 0 : index
    %c0_35 = arith.constant 0 : index
    %88 = vector.load %arg16[%c0_33, %c3, %c0_34, %c0_35] : memref<1x4x8x8xf32, #tpu.memory_space<vmem>>, vector<1x1x8x8xf32>
    %89 = vector.shape_cast %88 : vector<1x1x8x8xf32> to vector<8x8xf32>
    %90 = vector.shape_cast %87 : vector<8x8xf32> to vector<1x1x8x8xf32>
    tpu.vector_store %arg16[%c0_33, %c3, %c0_34, %c0_35], %90 {strides = array<i32>} : memref<1x4x8x8xf32, #tpu.memory_space<vmem>>, vector<1x1x8x8xf32>,
    %91 = arith.truncf %87 : vector<8x8xf32> to vector<8x8xbf16>
    %92 = vector.extract_strided_slice %11 {offsets = [0, 24], sizes = [8, 8], strides = [1, 1]} : vector<8x32xbf16> to vector<8x8xbf16>
    %cst_36 = arith.constant dense<0.000000e+00> : vector<8x8xf32>
    %93 = tpu.matmul %91, %92, %cst_36 {dimension_numbers = #tpu.dot_dimension_numbers<[1], [0], [0], [1], [0, 0, 1, 1], [], []>} : vector<8x8xbf16>, vector<8x8xbf16>, vector<8x8xf32> -> vector<8x8xf32>
    %94 = arith.truncf %93 : vector<8x8xf32> to vector<8x8xbf16>
    %c0_37 = arith.constant 0 : index
    %c24 = arith.constant 24 : index
    %95 = vector.load %arg18[%c0_37, %c24] : memref<8x32xbf16, #tpu.memory_space<vmem>>, vector<8x8xbf16>
    tpu.vector_store %arg18[%c0_37, %c24], %94 {strides = array<i32>} : memref<8x32xbf16, #tpu.memory_space<vmem>>, vector<8x8xbf16>,
    %c0_38 = arith.constant 0 : index
    %c0_39 = arith.constant 0 : index
    %96 = vector.load %arg18[%c0_38, %c0_39] : memref<8x32xbf16, #tpu.memory_space<vmem>>, vector<8x32xbf16>
    %c0_40 = arith.constant 0 : index
    %c0_41 = arith.constant 0 : index
    %97 = vector.load %arg5[%c0_40, %c0_41] : memref<32x32xbf16, #tpu.memory_space<vmem>>, vector<32x32xbf16>
    %cst_42 = arith.constant dense<0.000000e+00> : vector<8x32xf32>
    %98 = tpu.matmul %96, %97, %cst_42 {dimension_numbers = #tpu.dot_dimension_numbers<[1], [0], [0], [1], [0, 0, 1, 1], [], []>} : vector<8x32xbf16>, vector<32x32xbf16>, vector<8x32xf32> -> vector<8x32xf32>
    %c0_43 = arith.constant 0 : index
    %c0_44 = arith.constant 0 : index
    %99 = vector.load %arg6[%c0_43, %c0_44] : memref<1x32xf32, #tpu.memory_space<vmem>>, vector<1x32xf32>
    %100 = vector.shape_cast %99 : vector<1x32xf32> to vector<32xf32>
    %101 = vector.shape_cast %100 : vector<32xf32> to vector<1x32xf32>
    %102 = vector.broadcast %101 : vector<1x32xf32> to vector<8x32xf32>
    %103 = arith.addf %98, %102 : vector<8x32xf32>
    %104 = arith.addf %7, %103 : vector<8x32xf32>
    %c0_45 = arith.constant 0 : index
    %c0_46 = arith.constant 0 : index
    %105 = vector.load %arg11[%c0_45, %c0_46] : memref<1x32xf32, #tpu.memory_space<vmem>>, vector<1x32xf32>
    %106 = vector.shape_cast %105 : vector<1x32xf32> to vector<32xf32>
    %c0_47 = arith.constant 0 : index
    %c0_48 = arith.constant 0 : index
    %107 = vector.load %arg12[%c0_47, %c0_48] : memref<1x32xf32, #tpu.memory_space<vmem>>, vector<1x32xf32>
    %108 = vector.shape_cast %107 : vector<1x32xf32> to vector<32xf32>
    %cst_49 = arith.constant dense<0.000000e+00> : vector<8xf32>
    %109 = vector.multi_reduction <add>, %104, %cst_49 [1] : vector<8x32xf32> to vector<8xf32>
    %110 = vector.shape_cast %109 : vector<8xf32> to vector<8x1xf32>
    %cst_50 = arith.constant 3.200000e+01 : f32
    %111 = vector.broadcast %cst_50 : f32 to vector<8x1xf32>
    %112 = arith.divf %110, %111 : vector<8x1xf32>
    %113 = vector.broadcast %112 : vector<8x1xf32> to vector<8x32xf32>
    %114 = arith.subf %104, %113 : vector<8x32xf32>
    %115 = arith.mulf %114, %114 : vector<8x32xf32>
    %cst_51 = arith.constant dense<0.000000e+00> : vector<8xf32>
    %116 = vector.multi_reduction <add>, %115, %cst_51 [1] : vector<8x32xf32> to vector<8xf32>
    %117 = vector.shape_cast %116 : vector<8xf32> to vector<8x1xf32>
    %cst_52 = arith.constant 3.200000e+01 : f32
    %118 = vector.broadcast %cst_52 : f32 to vector<8x1xf32>
    %119 = arith.divf %117, %118 : vector<8x1xf32>
    %120 = vector.broadcast %112 : vector<8x1xf32> to vector<8x32xf32>
    %121 = arith.subf %104, %120 : vector<8x32xf32>
    %cst_53 = arith.constant 9.99999974E-6 : f32
    %122 = vector.broadcast %cst_53 : f32 to vector<8x1xf32>
    %123 = arith.addf %119, %122 : vector<8x1xf32>
    %124 = math.rsqrt %123 : vector<8x1xf32>
    %125 = vector.broadcast %124 : vector<8x1xf32> to vector<8x32xf32>
    %126 = arith.mulf %121, %125 : vector<8x32xf32>
    %127 = vector.shape_cast %106 : vector<32xf32> to vector<1x32xf32>
    %128 = vector.broadcast %127 : vector<1x32xf32> to vector<8x32xf32>
    %129 = arith.mulf %126, %128 : vector<8x32xf32>
    %130 = vector.shape_cast %108 : vector<32xf32> to vector<1x32xf32>
    %131 = vector.broadcast %130 : vector<1x32xf32> to vector<8x32xf32>
    %132 = arith.addf %129, %131 : vector<8x32xf32>
    %133 = arith.truncf %132 : vector<8x32xf32> to vector<8x32xbf16>
    %c0_54 = arith.constant 0 : index
    %c0_55 = arith.constant 0 : index
    %134 = vector.load %arg7[%c0_54, %c0_55] : memref<32x64xbf16, #tpu.memory_space<vmem>>, vector<32x64xbf16>
    %cst_56 = arith.constant dense<0.000000e+00> : vector<8x64xf32>
    %135 = tpu.matmul %133, %134, %cst_56 {dimension_numbers = #tpu.dot_dimension_numbers<[1], [0], [0], [1], [0, 0, 1, 1], [], []>} : vector<8x32xbf16>, vector<32x64xbf16>, vector<8x64xf32> -> vector<8x64xf32>
    %c0_57 = arith.constant 0 : index
    %c0_58 = arith.constant 0 : index
    %136 = vector.load %arg8[%c0_57, %c0_58] : memref<1x64xf32, #tpu.memory_space<vmem>>, vector<1x64xf32>
    %137 = vector.shape_cast %136 : vector<1x64xf32> to vector<64xf32>
    %138 = vector.shape_cast %137 : vector<64xf32> to vector<1x64xf32>
    %139 = vector.broadcast %138 : vector<1x64xf32> to vector<8x64xf32>
    %140 = arith.addf %135, %139 : vector<8x64xf32>
    %cst_59 = arith.constant 0.000000e+00 : f32
    %141 = vector.broadcast %cst_59 : f32 to vector<8x64xf32>
    %142 = arith.maximumf %140, %141 : vector<8x64xf32>
    %143 = arith.truncf %142 : vector<8x64xf32> to vector<8x64xbf16>
    %c0_60 = arith.constant 0 : index
    %c0_61 = arith.constant 0 : index
    %144 = vector.load %arg9[%c0_60, %c0_61] : memref<64x32xbf16, #tpu.memory_space<vmem>>, vector<64x32xbf16>
    %cst_62 = arith.constant dense<0.000000e+00> : vector<8x32xf32>
    %145 = tpu.matmul %143, %144, %cst_62 {dimension_numbers = #tpu.dot_dimension_numbers<[1], [0], [0], [1], [0, 0, 1, 1], [], []>} : vector<8x64xbf16>, vector<64x32xbf16>, vector<8x32xf32> -> vector<8x32xf32>
    %c0_63 = arith.constant 0 : index
    %c0_64 = arith.constant 0 : index
    %146 = vector.load %arg10[%c0_63, %c0_64] : memref<1x32xf32, #tpu.memory_space<vmem>>, vector<1x32xf32>
    %147 = vector.shape_cast %146 : vector<1x32xf32> to vector<32xf32>
    %148 = vector.shape_cast %147 : vector<32xf32> to vector<1x32xf32>
    %149 = vector.broadcast %148 : vector<1x32xf32> to vector<8x32xf32>
    %150 = arith.addf %145, %149 : vector<8x32xf32>
    %151 = arith.addf %132, %150 : vector<8x32xf32>
    %c0_65 = arith.constant 0 : index
    %c0_66 = arith.constant 0 : index
    %152 = vector.load %arg13[%c0_65, %c0_66] : memref<1x32xf32, #tpu.memory_space<vmem>>, vector<1x32xf32>
    %153 = vector.shape_cast %152 : vector<1x32xf32> to vector<32xf32>
    %c0_67 = arith.constant 0 : index
    %c0_68 = arith.constant 0 : index
    %154 = vector.load %arg14[%c0_67, %c0_68] : memref<1x32xf32, #tpu.memory_space<vmem>>, vector<1x32xf32>
    %155 = vector.shape_cast %154 : vector<1x32xf32> to vector<32xf32>
    %cst_69 = arith.constant dense<0.000000e+00> : vector<8xf32>
    %156 = vector.multi_reduction <add>, %151, %cst_69 [1] : vector<8x32xf32> to vector<8xf32>
    %157 = vector.shape_cast %156 : vector<8xf32> to vector<8x1xf32>
    %cst_70 = arith.constant 3.200000e+01 : f32
    %158 = vector.broadcast %cst_70 : f32 to vector<8x1xf32>
    %159 = arith.divf %157, %158 : vector<8x1xf32>
    %160 = vector.broadcast %159 : vector<8x1xf32> to vector<8x32xf32>
    %161 = arith.subf %151, %160 : vector<8x32xf32>
    %162 = arith.mulf %161, %161 : vector<8x32xf32>
    %cst_71 = arith.constant dense<0.000000e+00> : vector<8xf32>
    %163 = vector.multi_reduction <add>, %162, %cst_71 [1] : vector<8x32xf32> to vector<8xf32>
    %164 = vector.shape_cast %163 : vector<8xf32> to vector<8x1xf32>
    %cst_72 = arith.constant 3.200000e+01 : f32
    %165 = vector.broadcast %cst_72 : f32 to vector<8x1xf32>
    %166 = arith.divf %164, %165 : vector<8x1xf32>
    %167 = vector.broadcast %159 : vector<8x1xf32> to vector<8x32xf32>
    %168 = arith.subf %151, %167 : vector<8x32xf32>
    %cst_73 = arith.constant 9.99999974E-6 : f32
    %169 = vector.broadcast %cst_73 : f32 to vector<8x1xf32>
    %170 = arith.addf %166, %169 : vector<8x1xf32>
    %171 = math.rsqrt %170 : vector<8x1xf32>
    %172 = vector.broadcast %171 : vector<8x1xf32> to vector<8x32xf32>
    %173 = arith.mulf %168, %172 : vector<8x32xf32>
    %174 = vector.shape_cast %153 : vector<32xf32> to vector<1x32xf32>
    %175 = vector.broadcast %174 : vector<1x32xf32> to vector<8x32xf32>
    %176 = arith.mulf %173, %175 : vector<8x32xf32>
    %177 = vector.shape_cast %155 : vector<32xf32> to vector<1x32xf32>
    %178 = vector.broadcast %177 : vector<1x32xf32> to vector<8x32xf32>
    %179 = arith.addf %176, %178 : vector<8x32xf32>
    %c0_74 = arith.constant 0 : index
    %c0_75 = arith.constant 0 : index
    %c0_76 = arith.constant 0 : index
    %180 = vector.load %arg15[%c0_74, %c0_75, %c0_76] : memref<1x8x32xf32, #tpu.memory_space<vmem>>, vector<1x8x32xf32>
    %181 = vector.shape_cast %180 : vector<1x8x32xf32> to vector<8x32xf32>
    %182 = vector.shape_cast %179 : vector<8x32xf32> to vector<1x8x32xf32>
    tpu.vector_store %arg15[%c0_74, %c0_75, %c0_76], %182 {strides = array<i32>} : memref<1x8x32xf32, #tpu.memory_space<vmem>>, vector<1x8x32xf32>,
    return
  }
  func.func @transform_0(%arg0: i32, %arg1: i32) -> (i32, i32, i32) {
    %c0_i32 = arith.constant 0 : i32
    %c0_i32_0 = arith.constant 0 : i32
    %c0_i32_1 = arith.constant 0 : i32
    return %arg0, %c0_i32, %c0_i32_0 : i32, i32, i32
  }
  func.func @transform_1(%arg0: i32, %arg1: i32) -> (i32, i32) {
    %c0_i32 = arith.constant 0 : i32
    %c0_i32_0 = arith.constant 0 : i32
    %c0_i32_1 = arith.constant 0 : i32
    return %c0_i32, %c0_i32_0 : i32, i32
  }
  func.func @transform_2(%arg0: i32, %arg1: i32) -> (i32, i32) {
    %c0_i32 = arith.constant 0 : i32
    %c0_i32_0 = arith.constant 0 : i32
    %c0_i32_1 = arith.constant 0 : i32
    return %c0_i32, %c0_i32_0 : i32, i32
  }
  func.func @transform_3(%arg0: i32, %arg1: i32) -> (i32, i32) {
    %c0_i32 = arith.constant 0 : i32
    %c0_i32_0 = arith.constant 0 : i32
    %c0_i32_1 = arith.constant 0 : i32
    return %c0_i32, %c0_i32_0 : i32, i32
  }
  func.func @transform_4(%arg0: i32, %arg1: i32) -> (i32, i32) {
    %c0_i32 = arith.constant 0 : i32
    %c0_i32_0 = arith.constant 0 : i32
    %c0_i32_1 = arith.constant 0 : i32
    return %c0_i32, %c0_i32_0 : i32, i32
  }
  func.func @transform_5(%arg0: i32, %arg1: i32) -> (i32, i32) {
    %c0_i32 = arith.constant 0 : i32
    %c0_i32_0 = arith.constant 0 : i32
    %c0_i32_1 = arith.constant 0 : i32
    return %c0_i32, %c0_i32_0 : i32, i32
  }
  func.func @transform_6(%arg0: i32, %arg1: i32) -> (i32, i32) {
    %c0_i32 = arith.constant 0 : i32
    %c0_i32_0 = arith.constant 0 : i32
    %c0_i32_1 = arith.constant 0 : i32
    return %c0_i32, %c0_i32_0 : i32, i32
  }
  func.func @transform_7(%arg0: i32, %arg1: i32) -> (i32, i32) {
    %c0_i32 = arith.constant 0 : i32
    %c0_i32_0 = arith.constant 0 : i32
    %c0_i32_1 = arith.constant 0 : i32
    return %c0_i32, %c0_i32_0 : i32, i32
  }
  func.func @transform_8(%arg0: i32, %arg1: i32) -> (i32, i32) {
    %c0_i32 = arith.constant 0 : i32
    %c0_i32_0 = arith.constant 0 : i32
    %c0_i32_1 = arith.constant 0 : i32
    return %c0_i32, %c0_i32_0 : i32, i32
  }
  func.func @transform_9(%arg0: i32, %arg1: i32) -> (i32, i32) {
    %c0_i32 = arith.constant 0 : i32
    %c0_i32_0 = arith.constant 0 : i32
    %c0_i32_1 = arith.constant 0 : i32
    return %c0_i32, %c0_i32_0 : i32, i32
  }
  func.func @transform_10(%arg0: i32, %arg1: i32) -> (i32, i32) {
    %c0_i32 = arith.constant 0 : i32
    %c0_i32_0 = arith.constant 0 : i32
    %c0_i32_1 = arith.constant 0 : i32
    return %c0_i32, %c0_i32_0 : i32, i32
  }
  func.func @transform_11(%arg0: i32, %arg1: i32) -> (i32, i32) {
    %c0_i32 = arith.constant 0 : i32
    %c0_i32_0 = arith.constant 0 : i32
    %c0_i32_1 = arith.constant 0 : i32
    return %c0_i32, %c0_i32_0 : i32, i32
  }
  func.func @transform_12(%arg0: i32, %arg1: i32) -> (i32, i32) {
    %c0_i32 = arith.constant 0 : i32
    %c0_i32_0 = arith.constant 0 : i32
    %c0_i32_1 = arith.constant 0 : i32
    return %c0_i32, %c0_i32_0 : i32, i32
  }
  func.func @transform_13(%arg0: i32, %arg1: i32) -> (i32, i32, i32) {
    %c0_i32 = arith.constant 0 : i32
    %c0_i32_0 = arith.constant 0 : i32
    return %arg0, %arg1, %c0_i32 : i32, i32, i32
  }
  func.func @transform_14(%arg0: i32, %arg1: i32) -> (i32, i32, i32, i32) {
    %c0_i32 = arith.constant 0 : i32
    %c0_i32_0 = arith.constant 0 : i32
    %c0_i32_1 = arith.constant 0 : i32
    return %arg0, %c0_i32, %arg1, %c0_i32_0 : i32, i32, i32, i32
  }
}

</mosaic_0001>

<llo_original>
// kernel: tpu_custom_call.1
$region0: #{tpu_custom_call.1}
  #allocation0 [shape = 'u32[]', space=smem, size = 0x4, offset = 0x4, fixed_abs, tag = 'smem constant byte address 0x4 - core index']
  #allocation1 [shape = 'u32[144,128]{1,0:T(1,128)}', space=vmem, size = 0x12000, scoped, tag = 'internal scratch']
  #allocation2 [shape = 'bf16[8,96]{1,0:T(8,128)(2,1)}', space=vmem, size = 0x800, scoped, tag = 'scratch operand']
  #allocation3 [shape = 'bf16[8,32]{1,0:T(8,128)(2,1)}', space=vmem, size = 0x800, scoped, tag = 'scratch operand']
  %s0 = inlined_call_operand.vmem [shape: f32[2,8,32], index: 0, kind: input, shape index: {}]
  %s1 = inlined_call_operand.vmem [shape: bf16[32,96], index: 1, kind: input, shape index: {}]
  %s2 = inlined_call_operand.vmem [shape: f32[1,96], index: 2, kind: input, shape index: {}]
  %s3 = inlined_call_operand.vmem [shape: bf16[32,32], index: 3, kind: input, shape index: {}]
  %s4 = inlined_call_operand.vmem [shape: f32[1,32], index: 4, kind: input, shape index: {}]
  %s5 = inlined_call_operand.hbm [shape: bf16[32,64], index: 5, kind: input, shape index: {}]
  %s6 = inlined_call_operand.vmem [shape: f32[1,64], index: 6, kind: input, shape index: {}]
  %s7 = inlined_call_operand.vmem [shape: bf16[64,32], index: 7, kind: input, shape index: {}]
  %s8 = inlined_call_operand.vmem [shape: f32[1,32], index: 8, kind: input, shape index: {}]
  %s9 = inlined_call_operand.vmem [shape: f32[1,32], index: 9, kind: input, shape index: {}]
  %s10 = inlined_call_operand.vmem [shape: f32[1,32], index: 10, kind: input, shape index: {}]
  %s11 = inlined_call_operand.vmem [shape: f32[1,32], index: 11, kind: input, shape index: {}]
  %s12 = inlined_call_operand.vmem [shape: f32[1,32], index: 12, kind: input, shape index: {}]
  %s13 = inlined_call_operand.hbm [shape: f32[2,8,32], index: 13, kind: output, shape index: {0}]
  %s14 = inlined_call_operand.hbm [shape: f32[2,4,8,8], index: 14, kind: output, shape index: {1}]
  %15 = xla_tuple %s13, %s14
  %s16 = sld [smem:[#allocation0]]
  $region101: #{tpu_custom_call.1} parent=0
    _
  %s18 = ssub.s32 1, %s16
  %s19 = scalar_select 0, %s18, %s16
  $region1: #{tpu_custom_call.1} parent=0
    #allocation4 [shape = 'u8[8192]{0}', space=vmem, size = 0x2000, scoped, tag = 'input window, operand 5, single buffered']
    #allocation5 [shape = 's32[2]{0}', space=sflag, size = 0x8, scoped, tag = 'scoped memory for tpu_custom_call.1']
    #allocation6 [shape = 's32[2]{0}', space=sflag, size = 0x8, scoped, tag = 'scoped memory for tpu_custom_call.1']
    #allocation7 [shape = 'u8[8192]{0}', space=vmem, size = 0x2000, scoped, tag = 'output window, operand 0']
    #allocation8 [shape = 'u8[32768]{0}', space=vmem, size = 0x8000, scoped, tag = 'output window, operand 1']
    #allocation9 [shape = 's32[2]{0}', space=sflag, size = 0x8, scoped, tag = 'scoped memory for tpu_custom_call.1']
    %20 = vsyncpa [#allocation5], 0
    %21 = vsyncpa [#allocation6], 0
    %s22 = scalar_lea.sflag [#allocation6], 1
    %23 = vsyncpa %s22, 0
    %24 = vsyncpa [#allocation9], 0
    %s25 = scalar_lea.sflag [#allocation9], 1
    %26 = vsyncpa %s25, 0
    loop: start=0, step=1, limit=4
    $region2: #{tpu_custom_call.1} parent=1 // loop_pre_header
      _
    $region3: #{tpu_custom_call.1} parent=1 // loop_header
      %s28 = sphi 0, %s32
      %p29 = scmp.ge.s32.totalorder %s28, 4
      %s35 = sphi 0, %s47
      %s36 = sphi 0, %s43
      %s37 = sphi 0, %s35
      %s38 = sphi 0, %s36
      %s39 = sphi 0, %s37
      %s40 = sphi 0, %s38
      %s50 = sphi 0, %s52
      %s53 = sphi 0, %s50
      %s54 = sphi 0, %s53
      %s70 = sphi 0, %s54
      %s74 = sphi 0, %s74
      %s76 = sphi 0, %s74
      %s77 = sphi 0, %s76
      %s91 = sphi 0, %s77
      %s95 = sphi 0, %s95
      %s97 = sphi 0, %s95
      %s98 = sphi 0, %s97
      %s112 = sphi 0, %s98
      %s116 = sphi 0, %s116
      %s118 = sphi 0, %s116
      %s119 = sphi 0, %s118
      %s133 = sphi 0, %s119
      %s137 = sphi 0, %s137
      %s139 = sphi 0, %s137
      %s140 = sphi 0, %s139
      %s154 = sphi 0, %s140
      %s158 = sphi 0, %s158
      %s160 = sphi 0, %s158
      %s161 = sphi 0, %s160
      %s175 = sphi 0, %s161
      %s179 = sphi 0, %s179
      %s181 = sphi 0, %s179
      %s182 = sphi 0, %s181
      %s196 = sphi 0, %s182
      %s200 = sphi 0, %s200
      %s202 = sphi 0, %s200
      %s203 = sphi 0, %s202
      %s217 = sphi 0, %s203
      %s221 = sphi 0, %s221
      %s223 = sphi 0, %s221
      %s224 = sphi 0, %s223
      %s238 = sphi 0, %s224
      %s242 = sphi 0, %s242
      %s244 = sphi 0, %s242
      %s245 = sphi 0, %s244
      %s259 = sphi 0, %s245
      %s263 = sphi 0, %s263
      %s265 = sphi 0, %s263
      %s266 = sphi 0, %s265
      %s280 = sphi 0, %s266
      %s284 = sphi 0, %s284
      %s286 = sphi 0, %s284
      %s287 = sphi 0, %s286
      %s301 = sphi 0, %s287
      %s305 = sphi 0, %s305
      %s307 = sphi 0, %s305
      %s308 = sphi 0, %s307
      %s322 = sphi 0, %s308
      %s330 = sphi 0, %s332
      %s333 = sphi 0, %s330
      %s334 = sphi 0, %s333
      %s350 = sphi 0, %s334
      %s358 = sphi 0, %s360
      %s361 = sphi 0, %s358
      %s362 = sphi 0, %s361
      %s378 = sphi 0, %s362
    $region4: #{tpu_custom_call.1} parent=1 // loop_header_branch
      %31 = sbr.rel (%p29) target = $region8
    $region5: #{tpu_custom_call.1} parent=1 // loop_body
      %s33 = ssub.s32 %s28, 1
      %s34 = ssub.s32 %s28, 2
      %s41 = sadd.s32 1, %s36
      %p42 = scmp.ge.s32.totalorder %s41, 1
      %s43 = scalar_select %p42, 0, %s41
      %s44 = sadd.s32 1, %s35
      %s45 = scalar_select %p42, %s44, %s35
      %p46 = scmp.ge.s32.totalorder %s45, 2
      %s47 = scalar_select %p46, 0, %s45
      %s48 = ssub.s32 %s35, %s47
      %p49 = scmp.eq.s32.totalorder %s48, 0
      %s51 = sadd.s32 %s50, 1
      %s52 = scalar_select %p49, %s50, %s51
      %p55 = pneg %p49
      %p56 = scmp.eq.s32.totalorder %s28, 1
      %p57 = por %p55, %p56
      %p58 = scmp.ne.s32.totalorder %s50, %s53
      %p59 = scmp.eq.s32.totalorder %s28, 0
      %p60 = por %p58, %p59
      %p61 = scmp.ne.s32.totalorder %s50, %s53
      %p62 = scmp.eq.s32.totalorder %s33, 1
      %p63 = por %p61, %p62
      %p64 = scmp.ne.s32.totalorder %s53, %s54
      %p65 = scmp.eq.s32.totalorder %s33, 0
      %p66 = por %p64, %p65
      %p67 = scmp.ne.s32.totalorder %s53, %s54
      %p68 = scmp.eq.s32.totalorder %s34, 1
      %p69 = por %p67, %p68
      %p71 = scmp.ne.s32.totalorder %s54, %s70
      %p72 = scmp.eq.s32.totalorder %s34, 0
      %p73 = por %p71, %p72
      %s75 = sadd.s32 %s74, 1
      %p78 = scmp.eq.s32.totalorder %s28, 1
      %p79 = scmp.ne.s32.totalorder %s74, %s76
      %p80 = scmp.eq.s32.totalorder %s28, 0
      %p81 = por %p79, %p80
      %p82 = scmp.ne.s32.totalorder %s74, %s76
      %p83 = scmp.eq.s32.totalorder %s33, 1
      %p84 = por %p82, %p83
      %p85 = scmp.ne.s32.totalorder %s76, %s77
      %p86 = scmp.eq.s32.totalorder %s33, 0
      %p87 = por %p85, %p86
      %p88 = scmp.ne.s32.totalorder %s76, %s77
      %p89 = scmp.eq.s32.totalorder %s34, 1
      %p90 = por %p88, %p89
      %p92 = scmp.ne.s32.totalorder %s77, %s91
      %p93 = scmp.eq.s32.totalorder %s34, 0
      %p94 = por %p92, %p93
      %s96 = sadd.s32 %s95, 1
      %p99 = scmp.eq.s32.totalorder %s28, 1
      %p100 = scmp.ne.s32.totalorder %s95, %s97
      %p101 = scmp.eq.s32.totalorder %s28, 0
      %p102 = por %p100, %p101
      %p103 = scmp.ne.s32.totalorder %s95, %s97
      %p104 = scmp.eq.s32.totalorder %s33, 1
      %p105 = por %p103, %p104
      %p106 = scmp.ne.s32.totalorder %s97, %s98
      %p107 = scmp.eq.s32.totalorder %s33, 0
      %p108 = por %p106, %p107
      %p109 = scmp.ne.s32.totalorder %s97, %s98
      %p110 = scmp.eq.s32.totalorder %s34, 1
      %p111 = por %p109, %p110
      %p113 = scmp.ne.s32.totalorder %s98, %s112
      %p114 = scmp.eq.s32.totalorder %s34, 0
      %p115 = por %p113, %p114
      %s117 = sadd.s32 %s116, 1
      %p120 = scmp.eq.s32.totalorder %s28, 1
      %p121 = scmp.ne.s32.totalorder %s116, %s118
      %p122 = scmp.eq.s32.totalorder %s28, 0
      %p123 = por %p121, %p122
      %p124 = scmp.ne.s32.totalorder %s116, %s118
      %p125 = scmp.eq.s32.totalorder %s33, 1
      %p126 = por %p124, %p125
      %p127 = scmp.ne.s32.totalorder %s118, %s119
      %p128 = scmp.eq.s32.totalorder %s33, 0
      %p129 = por %p127, %p128
      %p130 = scmp.ne.s32.totalorder %s118, %s119
      %p131 = scmp.eq.s32.totalorder %s34, 1
      %p132 = por %p130, %p131
      %p134 = scmp.ne.s32.totalorder %s119, %s133
      %p135 = scmp.eq.s32.totalorder %s34, 0
      %p136 = por %p134, %p135
      %s138 = sadd.s32 %s137, 1
      %p141 = scmp.eq.s32.totalorder %s28, 1
      %p142 = scmp.ne.s32.totalorder %s137, %s139
      %p143 = scmp.eq.s32.totalorder %s28, 0
      %p144 = por %p142, %p143
      %p145 = scmp.ne.s32.totalorder %s137, %s139
      %p146 = scmp.eq.s32.totalorder %s33, 1
      %p147 = por %p145, %p146
      %p148 = scmp.ne.s32.totalorder %s139, %s140
      %p149 = scmp.eq.s32.totalorder %s33, 0
      %p150 = por %p148, %p149
      %p151 = scmp.ne.s32.totalorder %s139, %s140
      %p152 = scmp.eq.s32.totalorder %s34, 1
      %p153 = por %p151, %p152
      %p155 = scmp.ne.s32.totalorder %s140, %s154
      %p156 = scmp.eq.s32.totalorder %s34, 0
      %p157 = por %p155, %p156
      %s159 = sadd.s32 %s158, 1
      %p162 = scmp.eq.s32.totalorder %s28, 1
      %p163 = scmp.ne.s32.totalorder %s158, %s160
      %p164 = scmp.eq.s32.totalorder %s28, 0
      %p165 = por %p163, %p164
      %p166 = scmp.ne.s32.totalorder %s158, %s160
      %p167 = scmp.eq.s32.totalorder %s33, 1
      %p168 = por %p166, %p167
      %p169 = scmp.ne.s32.totalorder %s160, %s161
      %p170 = scmp.eq.s32.totalorder %s33, 0
      %p171 = por %p169, %p170
      %p172 = scmp.ne.s32.totalorder %s160, %s161
      %p173 = scmp.eq.s32.totalorder %s34, 1
      %p174 = por %p172, %p173
      %p176 = scmp.ne.s32.totalorder %s161, %s175
      %p177 = scmp.eq.s32.totalorder %s34, 0
      %p178 = por %p176, %p177
      %s180 = sadd.s32 %s179, 1
      %p183 = scmp.eq.s32.totalorder %s28, 1
      %p184 = scmp.ne.s32.totalorder %s179, %s181
      %p185 = scmp.eq.s32.totalorder %s28, 0
      %p186 = por %p184, %p185
      %p187 = scmp.ne.s32.totalorder %s179, %s181
      %p188 = scmp.eq.s32.totalorder %s33, 1
      %p189 = por %p187, %p188
      %p190 = scmp.ne.s32.totalorder %s181, %s182
      %p191 = scmp.eq.s32.totalorder %s33, 0
      %p192 = por %p190, %p191
      %p193 = scmp.ne.s32.totalorder %s181, %s182
      %p194 = scmp.eq.s32.totalorder %s34, 1
      %p195 = por %p193, %p194
      %p197 = scmp.ne.s32.totalorder %s182, %s196
      %p198 = scmp.eq.s32.totalorder %s34, 0
      %p199 = por %p197, %p198
      %s201 = sadd.s32 %s200, 1
      %p204 = scmp.eq.s32.totalorder %s28, 1
      %p205 = scmp.ne.s32.totalorder %s200, %s202
      %p206 = scmp.eq.s32.totalorder %s28, 0
      %p207 = por %p205, %p206
      %p208 = scmp.ne.s32.totalorder %s200, %s202
      %p209 = scmp.eq.s32.totalorder %s33, 1
      %p210 = por %p208, %p209
      %p211 = scmp.ne.s32.totalorder %s202, %s203
      %p212 = scmp.eq.s32.totalorder %s33, 0
      %p213 = por %p211, %p212
      %p214 = scmp.ne.s32.totalorder %s202, %s203
      %p215 = scmp.eq.s32.totalorder %s34, 1
      %p216 = por %p214, %p215
      %p218 = scmp.ne.s32.totalorder %s203, %s217
      %p219 = scmp.eq.s32.totalorder %s34, 0
      %p220 = por %p218, %p219
      %s222 = sadd.s32 %s221, 1
      %p225 = scmp.eq.s32.totalorder %s28, 1
      %p226 = scmp.ne.s32.totalorder %s221, %s223
      %p227 = scmp.eq.s32.totalorder %s28, 0
      %p228 = por %p226, %p227
      %p229 = scmp.ne.s32.totalorder %s221, %s223
      %p230 = scmp.eq.s32.totalorder %s33, 1
      %p231 = por %p229, %p230
      %p232 = scmp.ne.s32.totalorder %s223, %s224
      %p233 = scmp.eq.s32.totalorder %s33, 0
      %p234 = por %p232, %p233
      %p235 = scmp.ne.s32.totalorder %s223, %s224
      %p236 = scmp.eq.s32.totalorder %s34, 1
      %p237 = por %p235, %p236
      %p239 = scmp.ne.s32.totalorder %s224, %s238
      %p240 = scmp.eq.s32.totalorder %s34, 0
      %p241 = por %p239, %p240
      %s243 = sadd.s32 %s242, 1
      %p246 = scmp.eq.s32.totalorder %s28, 1
      %p247 = scmp.ne.s32.totalorder %s242, %s244
      %p248 = scmp.eq.s32.totalorder %s28, 0
      %p249 = por %p247, %p248
      %p250 = scmp.ne.s32.totalorder %s242, %s244
      %p251 = scmp.eq.s32.totalorder %s33, 1
      %p252 = por %p250, %p251
      %p253 = scmp.ne.s32.totalorder %s244, %s245
      %p254 = scmp.eq.s32.totalorder %s33, 0
      %p255 = por %p253, %p254
      %p256 = scmp.ne.s32.totalorder %s244, %s245
      %p257 = scmp.eq.s32.totalorder %s34, 1
      %p258 = por %p256, %p257
      %p260 = scmp.ne.s32.totalorder %s245, %s259
      %p261 = scmp.eq.s32.totalorder %s34, 0
      %p262 = por %p260, %p261
      %s264 = sadd.s32 %s263, 1
      %p267 = scmp.eq.s32.totalorder %s28, 1
      %p268 = scmp.ne.s32.totalorder %s263, %s265
      %p269 = scmp.eq.s32.totalorder %s28, 0
      %p270 = por %p268, %p269
      %p271 = scmp.ne.s32.totalorder %s263, %s265
      %p272 = scmp.eq.s32.totalorder %s33, 1
      %p273 = por %p271, %p272
      %p274 = scmp.ne.s32.totalorder %s265, %s266
      %p275 = scmp.eq.s32.totalorder %s33, 0
      %p276 = por %p274, %p275
      %p277 = scmp.ne.s32.totalorder %s265, %s266
      %p278 = scmp.eq.s32.totalorder %s34, 1
      %p279 = por %p277, %p278
      %p281 = scmp.ne.s32.totalorder %s266, %s280
      %p282 = scmp.eq.s32.totalorder %s34, 0
      %p283 = por %p281, %p282
      %s285 = sadd.s32 %s284, 1
      %p288 = scmp.eq.s32.totalorder %s28, 1
      %p289 = scmp.ne.s32.totalorder %s284, %s286
      %p290 = scmp.eq.s32.totalorder %s28, 0
      %p291 = por %p289, %p290
      %p292 = scmp.ne.s32.totalorder %s284, %s286
      %p293 = scmp.eq.s32.totalorder %s33, 1
      %p294 = por %p292, %p293
      %p295 = scmp.ne.s32.totalorder %s286, %s287
      %p296 = scmp.eq.s32.totalorder %s33, 0
      %p297 = por %p295, %p296
      %p298 = scmp.ne.s32.totalorder %s286, %s287
      %p299 = scmp.eq.s32.totalorder %s34, 1
      %p300 = por %p298, %p299
      %p302 = scmp.ne.s32.totalorder %s287, %s301
      %p303 = scmp.eq.s32.totalorder %s34, 0
      %p304 = por %p302, %p303
      %s306 = sadd.s32 %s305, 1
      %p309 = scmp.eq.s32.totalorder %s28, 1
      %p310 = scmp.ne.s32.totalorder %s305, %s307
      %p311 = scmp.eq.s32.totalorder %s28, 0
      %p312 = por %p310, %p311
      %p313 = scmp.ne.s32.totalorder %s305, %s307
      %p314 = scmp.eq.s32.totalorder %s33, 1
      %p315 = por %p313, %p314
      %p316 = scmp.ne.s32.totalorder %s307, %s308
      %p317 = scmp.eq.s32.totalorder %s33, 0
      %p318 = por %p316, %p317
      %p319 = scmp.ne.s32.totalorder %s307, %s308
      %p320 = scmp.eq.s32.totalorder %s34, 1
      %p321 = por %p319, %p320
      %p323 = scmp.ne.s32.totalorder %s308, %s322
      %p324 = scmp.eq.s32.totalorder %s34, 0
      %p325 = por %p323, %p324
      %s326 = ssub.s32 %s35, %s47
      %s327 = ssub.s32 %s36, %s43
      %s328 = sor.u32 %s326, %s327
      %p329 = scmp.eq.s32.totalorder %s328, 0
      %s331 = sadd.s32 %s330, 1
      %s332 = scalar_select %p329, %s330, %s331
      %p335 = pneg %p329
      %p336 = scmp.eq.s32.totalorder %s28, 1
      %p337 = por %p335, %p336
      %p338 = scmp.ne.s32.totalorder %s330, %s333
      %p339 = scmp.eq.s32.totalorder %s28, 0
      %p340 = por %p338, %p339
      %p341 = scmp.ne.s32.totalorder %s330, %s333
      %p342 = scmp.eq.s32.totalorder %s33, 1
      %p343 = por %p341, %p342
      %p344 = scmp.ne.s32.totalorder %s333, %s334
      %p345 = scmp.eq.s32.totalorder %s33, 0
      %p346 = por %p344, %p345
      %p347 = scmp.ne.s32.totalorder %s333, %s334
      %p348 = scmp.eq.s32.totalorder %s34, 1
      %p349 = por %p347, %p348
      %p351 = scmp.ne.s32.totalorder %s334, %s350
      %p352 = scmp.eq.s32.totalorder %s34, 0
      %p353 = por %p351, %p352
      %s354 = ssub.s32 %s35, %s47
      %s355 = ssub.s32 %s36, %s43
      %s356 = sor.u32 %s354, %s355
      %p357 = scmp.eq.s32.totalorder %s356, 0
      %s359 = sadd.s32 %s358, 1
      %s360 = scalar_select %p357, %s358, %s359
      %p363 = pneg %p357
      %p364 = scmp.eq.s32.totalorder %s28, 1
      %p365 = por %p363, %p364
      %p366 = scmp.ne.s32.totalorder %s358, %s361
      %p367 = scmp.eq.s32.totalorder %s28, 0
      %p368 = por %p366, %p367
      %p369 = scmp.ne.s32.totalorder %s358, %s361
      %p370 = scmp.eq.s32.totalorder %s33, 1
      %p371 = por %p369, %p370
      %p372 = scmp.ne.s32.totalorder %s361, %s362
      %p373 = scmp.eq.s32.totalorder %s33, 0
      %p374 = por %p372, %p373
      %p375 = scmp.ne.s32.totalorder %s361, %s362
      %p376 = scmp.eq.s32.totalorder %s34, 1
      %p377 = por %p375, %p376
      %p379 = scmp.ne.s32.totalorder %s362, %s378
      %p380 = scmp.eq.s32.totalorder %s34, 0
      %p381 = por %p379, %p380
      %p382 = scmp.le.s32.totalorder 1, %s28
      %p383 = scmp.lt.s32.totalorder %s28, 3
      %p384 = pnand %p382, %p383
      %p385 = pneg %p384
      // Predicated region
      $region9: #{tpu_custom_call.1} parent=5 // pred_check
        _
      $region10: #{tpu_custom_call.1} parent=5 // pred_check_branch
        %387 = sbr.rel (%p384) target = $region12
      $region11: #{tpu_custom_call.1} parent=5 // pred_region
        %s388 = ssub.s32 %s28, 1
        // Predicated region
        $region13: #{tpu_custom_call.1} parent=11 // pred_check
          %p389 = pneg %p87
        $region14: #{tpu_custom_call.1} parent=11 // pred_check_branch
          %391 = sbr.rel (%p389) target = $region16
        $region15: #{tpu_custom_call.1} parent=11 // pred_region
          _
        $region16: #{tpu_custom_call.1} parent=11 // pred_fallthru
          _
        // Predicated region
        $region17: #{tpu_custom_call.1} parent=11 // pred_check
          %p392 = pneg %p108
        $region18: #{tpu_custom_call.1} parent=11 // pred_check_branch
          %394 = sbr.rel (%p392) target = $region20
        $region19: #{tpu_custom_call.1} parent=11 // pred_region
          _
        $region20: #{tpu_custom_call.1} parent=11 // pred_fallthru
          _
        // Predicated region
        $region21: #{tpu_custom_call.1} parent=11 // pred_check
          %p395 = pneg %p129
        $region22: #{tpu_custom_call.1} parent=11 // pred_check_branch
          %397 = sbr.rel (%p395) target = $region24
        $region23: #{tpu_custom_call.1} parent=11 // pred_region
          _
        $region24: #{tpu_custom_call.1} parent=11 // pred_fallthru
          _
        // Predicated region
        $region25: #{tpu_custom_call.1} parent=11 // pred_check
          %p398 = pneg %p150
        $region26: #{tpu_custom_call.1} parent=11 // pred_check_branch
          %400 = sbr.rel (%p398) target = $region28
        $region27: #{tpu_custom_call.1} parent=11 // pred_region
          _
        $region28: #{tpu_custom_call.1} parent=11 // pred_fallthru
          _
        // Predicated region
        $region29: #{tpu_custom_call.1} parent=11 // pred_check
          %p401 = pneg %p171
        $region30: #{tpu_custom_call.1} parent=11 // pred_check_branch
          %403 = sbr.rel (%p401) target = $region32
        $region31: #{tpu_custom_call.1} parent=11 // pred_region
          %s405 = ssub.s32 256, 256
          %406 = vsyncadd [#allocation5], %s405
          %s407 = sshll.u32 [#allocation4], 4
          %s408 = int_to_ptr.vmem [resolvable:$true] %s407
          %413 = dma.hbm_to_vmem [thread:$0]  %s5, 256, %s408, [#allocation5], 64, 64, 4
        $region32: #{tpu_custom_call.1} parent=11 // pred_fallthru
          _
        // Predicated region
        $region33: #{tpu_custom_call.1} parent=11 // pred_check
          %p414 = pneg %p192
        $region34: #{tpu_custom_call.1} parent=11 // pred_check_branch
          %416 = sbr.rel (%p414) target = $region36
        $region35: #{tpu_custom_call.1} parent=11 // pred_region
          _
        $region36: #{tpu_custom_call.1} parent=11 // pred_fallthru
          _
        // Predicated region
        $region37: #{tpu_custom_call.1} parent=11 // pred_check
          %p417 = pneg %p213
        $region38: #{tpu_custom_call.1} parent=11 // pred_check_branch
          %419 = sbr.rel (%p417) target = $region40
        $region39: #{tpu_custom_call.1} parent=11 // pred_region
          _
        $region40: #{tpu_custom_call.1} parent=11 // pred_fallthru
          _
        // Predicated region
        $region41: #{tpu_custom_call.1} parent=11 // pred_check
          %p420 = pneg %p234
        $region42: #{tpu_custom_call.1} parent=11 // pred_check_branch
          %422 = sbr.rel (%p420) target = $region44
        $region43: #{tpu_custom_call.1} parent=11 // pred_region
          _
        $region44: #{tpu_custom_call.1} parent=11 // pred_fallthru
          _
        // Predicated region
        $region45: #{tpu_custom_call.1} parent=11 // pred_check
          %p423 = pneg %p255
        $region46: #{tpu_custom_call.1} parent=11 // pred_check_branch
          %425 = sbr.rel (%p423) target = $region48
        $region47: #{tpu_custom_call.1} parent=11 // pred_region
          _
        $region48: #{tpu_custom_call.1} parent=11 // pred_fallthru
          _
        // Predicated region
        $region49: #{tpu_custom_call.1} parent=11 // pred_check
          %p426 = pneg %p276
        $region50: #{tpu_custom_call.1} parent=11 // pred_check_branch
          %428 = sbr.rel (%p426) target = $region52
        $region51: #{tpu_custom_call.1} parent=11 // pred_region
          _
        $region52: #{tpu_custom_call.1} parent=11 // pred_fallthru
          _
        // Predicated region
        $region53: #{tpu_custom_call.1} parent=11 // pred_check
          %p429 = pneg %p297
        $region54: #{tpu_custom_call.1} parent=11 // pred_check_branch
          %431 = sbr.rel (%p429) target = $region56
        $region55: #{tpu_custom_call.1} parent=11 // pred_region
          _
        $region56: #{tpu_custom_call.1} parent=11 // pred_fallthru
          _
        // Predicated region
        $region57: #{tpu_custom_call.1} parent=11 // pred_check
          %p432 = pneg %p318
        $region58: #{tpu_custom_call.1} parent=11 // pred_check_branch
          %434 = sbr.rel (%p432) target = $region60
        $region59: #{tpu_custom_call.1} parent=11 // pred_region
          _
        $region60: #{tpu_custom_call.1} parent=11 // pred_fallthru
          _
      $region12: #{tpu_custom_call.1} parent=5 // pred_fallthru
        _
      %p435 = scmp.lt.s32.totalorder %s28, 2
      // Predicated region
      $region61: #{tpu_custom_call.1} parent=5 // pred_check
        %p436 = pneg %p435
      $region62: #{tpu_custom_call.1} parent=5 // pred_check_branch
        %438 = sbr.rel (%p436) target = $region64
      $region63: #{tpu_custom_call.1} parent=5 // pred_region
        // Predicated region
        $region65: #{tpu_custom_call.1} parent=63 // pred_check
          %p439 = pneg %p60
        $region66: #{tpu_custom_call.1} parent=63 // pred_check_branch
          %441 = sbr.rel (%p439) target = $region68
        $region67: #{tpu_custom_call.1} parent=63 // pred_region
          %p442 = scmp.lt.s32.totalorder %s35, 1
          %s443 = scalar_select %p442, %s35, 1
          %s444 = smul.addr %s443, 8
          %s445 = scalar_lea.vmem %s0, %s444
        $region68: #{tpu_custom_call.1} parent=63 // pred_fallthru
          _
      $region64: #{tpu_custom_call.1} parent=5 // pred_fallthru
        _
      %p446 = scmp.le.s32.totalorder 1, %s28
      %p447 = scmp.lt.s32.totalorder %s28, 3
      %p448 = pnand %p446, %p447
      %p449 = pneg %p448
      // Predicated region
      $region69: #{tpu_custom_call.1} parent=5 // pred_check
        _
      $region70: #{tpu_custom_call.1} parent=5 // pred_check_branch
        %451 = sbr.rel (%p448) target = $region72
      $region71: #{tpu_custom_call.1} parent=5 // pred_region
        %s452 = ssub.s32 %s28, 1
        // Predicated region
        $region73: #{tpu_custom_call.1} parent=71 // pred_check
          %p453 = pneg %p171
        $region74: #{tpu_custom_call.1} parent=71 // pred_check_branch
          %455 = sbr.rel (%p453) target = $region76
        $region75: #{tpu_custom_call.1} parent=71 // pred_region
          %456 = dma.done [#allocation5], 256
        $region76: #{tpu_custom_call.1} parent=71 // pred_fallthru
          _
        %p457 = scmp.lt.s32.totalorder %s37, 1
        %s458 = scalar_select %p457, %s37, 1
        %s459 = smul.addr %s458, 8
        %s460 = scalar_lea.vmem %s0, %s459
        %p461 = pneg %p66
        %p462 = pneg %p63
        %p463 = pneg %p87
        %p464 = pneg %p84
        %p465 = pneg %p108
        %p466 = pneg %p105
        %p467 = pneg %p129
        %p468 = pneg %p126
        %p469 = pneg %p150
        %p470 = pneg %p147
        %p471 = pneg %p171
        %p472 = pneg %p168
        %p473 = pneg %p192
        %p474 = pneg %p189
        %p475 = pneg %p213
        %p476 = pneg %p210
        %p477 = pneg %p234
        %p478 = pneg %p231
        %p479 = pneg %p255
        %p480 = pneg %p252
        %p481 = pneg %p276
        %p482 = pneg %p273
        %p483 = pneg %p297
        %p484 = pneg %p294
        %p485 = pneg %p318
        %p486 = pneg %p315
        %p487 = pneg %p346
        %p488 = pneg %p343
        %s489 = sand.u32 %s333, 1
        %s490 = scalar_lea.sflag [#allocation6], %s489
        %s491 = sand.u32 %s333, 1
        %s492 = smul.addr %s491, 8
        %s493 = scalar_lea.vmem [#allocation7], %s492
        %p494 = pneg %p374
        %p495 = pneg %p371
        %s496 = sand.u32 %s361, 1
        %s497 = scalar_lea.sflag [#allocation9], %s496
        %s498 = sand.u32 %s361, 1
        %s499 = smul.addr %s498, 32
        %s500 = scalar_lea.vmem [#allocation8], %s499
        %p501 = scmp.lt.s32.totalorder %s37, 1
        %s502 = scalar_select %p501, %s37, 1
        %s503 = smul.addr %s502, 8
        %s504 = scalar_lea.vmem %s0, %s503
        %p506 = scmp.eq.s32.totalorder %s38, 0
        // Predicated region
        $region77: #{tpu_custom_call.1} parent=71 // pred_check
          %p507 = pneg %p506
        $region78: #{tpu_custom_call.1} parent=71 // pred_check_branch
          %509 = sbr.rel (%p507) target = $region80
        $region79: #{tpu_custom_call.1} parent=71 // pred_region
          %v510 = vld [vmem:[%s504] sm:$0xff]
          %v511 = vpack.c.bf16 %v510, %v510
          %v512 = vld [vmem:[%s1] sm:$0xf]
          %v513 = vld [vmem:[%s1 + $0x4] sm:$0xf]
          %v514 = vld [vmem:[%s1 + $0x8] sm:$0xf]
          %v515 = vld [vmem:[%s1 + $0xc] sm:$0xf]
          %v516 = vld [vmem:[%s2] sm:$0x1]
          %v518 = vlaneseq
          %v519 = vshrl.u32 %v518, 7
          %v520 = vsub.s32 0, %v519
          %v521 = vrot.slane %v516, %v520
          %v527 = vunpack.c.l.b16 %v512
          %v528 = vunpack.c.l.b16 %v513
          %v529 = vunpack.c.l.b16 %v514
          %v530 = vunpack.c.l.b16 %v515
          %v531 = vpack.c.b16 %v528, %v527
          %v532 = vpack.c.b16 %v530, %v529
          %vm535 = vcmask 261120
          %v537 = vsel %vm535, %v511, 0
          %539 = vmatprep.subr.bf16.mxu0 0
          %540 = vmatpush1.bf16.msra.mxu0 %v531
          %541 = vmatprep.subr.bf16.mxu0 0
          %542 = vmatpush1.bf16.msra.mxu0 %v532
          %543 = vmatprep.subr.bf16.mxu0 0
          %544 = vmatpush1.bf16.msra.mxu0 0
          %545 = vmatprep.subr.bf16.mxu0 0
          %546 = vmatpush1.bf16.msra.mxu0 0
          %547 = vmatprep.subr.bf16.mxu0 0
          %548 = vmatpush1.bf16.msra.mxu0 0
          %549 = vmatprep.subr.bf16.mxu0 0
          %550 = vmatpush1.bf16.msra.mxu0 0
          %551 = vmatprep.subr.bf16.mxu0 0
          %552 = vmatpush1.bf16.msra.mxu0 0
          %553 = vmatprep.subr.bf16.mxu0 0
          %554 = vmatpush1.bf16.msra.mxu0 0
          %555 = vmatprep.subr.bf16.mxu0 0
          %556 = vmatpush1.bf16.msra.mxu0 0
          %557 = vmatprep.subr.bf16.mxu0 0
          %558 = vmatpush1.bf16.msra.mxu0 0
          %559 = vmatprep.subr.bf16.mxu0 0
          %560 = vmatpush1.bf16.msra.mxu0 0
          %561 = vmatprep.subr.bf16.mxu0 0
          %562 = vmatpush1.bf16.msra.mxu0 0
          %563 = vmatprep.subr.bf16.mxu0 0
          %564 = vmatpush1.bf16.msra.mxu0 0
          %565 = vmatprep.subr.bf16.mxu0 0
          %566 = vmatpush1.bf16.msra.mxu0 0
          %567 = vmatprep.subr.bf16.mxu0 0
          %568 = vmatpush1.bf16.msra.mxu0 0
          %569 = vmatprep.subr.bf16.mxu0 0
          %570 = vmatpush1.bf16.msra.mxu0 0
          %571 = vmatprep.mubr.bf16.mxu0 0
          %572 = vmatmul.mubr.bf16.gmra.mrb[0].mxu0 %v537
          %v573 = vpop.f32.mrb[0].mxu0
          %v574 = vadd.f32 %v521, %v573
          %v575 = vpop.f32.mrb[0].mxu0
          %v576 = vpop.f32.mrb[0].mxu0
          %v577 = vpop.f32.mrb[0].mxu0
          %578 = vdwg.mxu0
          %v579 = vpack.c.bf16 %v574, %v574
          %vm580 = vcmask 781312
          %581 = vst.msk [vmem:[#allocation2] sm:$0xf] %vm580, %v579
        $region80: #{tpu_custom_call.1} parent=71 // pred_fallthru
          _
        %s582 = smul.u32 %s38, 8
        %s583 = scalar_lea.vmem %s504, %s582
        %v584 = vld [vmem:[%s583] sm:$0xff]
        %s585 = sshra.s32 %s582, 3
        %s586 = sand.u32 %s582, 7
        %s587 = smul.addr %s585, 4
        %s588 = scalar_lea.vmem [#allocation2], %s587
        %v589 = vld [vmem:[%s588] sm:$0xf]
        %v590 = vld [vmem:[#allocation2] sm:$0xf]
        %v592 = vunpack.c.l.b16 %v590
        %v593 = vpack.c.b16 %v592, %v592
        %594 = vrot.lane.b32.xlu0 %v593, 96
        %v595 = vpop.permute.xlu0 %594
        %vm596 = vcmask 64512
        %v598 = vsel %vm596, %v589, 0
        %v601 = vsel %vm596, %v595, 0
        %603 = vmatprep.subr.bf16.mxu0 0
        %604 = vmatpush1.bf16.xpose.msra.mxu0 %v601
        %605 = vmatprep.subr.bf16.mxu0 0
        %606 = vmatpush1.bf16.xpose.msra.mxu0 0
        %607 = vmatprep.subr.bf16.mxu0 0
        %608 = vmatpush1.bf16.xpose.msra.mxu0 0
        %609 = vmatprep.subr.bf16.mxu0 0
        %610 = vmatpush1.bf16.xpose.msra.mxu0 0
        %611 = vmatprep.subr.bf16.mxu0 0
        %612 = vmatpush1.bf16.xpose.msra.mxu0 0
        %613 = vmatprep.subr.bf16.mxu0 0
        %614 = vmatpush1.bf16.xpose.msra.mxu0 0
        %615 = vmatprep.subr.bf16.mxu0 0
        %616 = vmatpush1.bf16.xpose.msra.mxu0 0
        %617 = vmatprep.subr.bf16.mxu0 0
        %618 = vmatpush1.bf16.xpose.msra.mxu0 0
        %619 = vmatprep.subr.bf16.mxu0 0
        %620 = vmatpush1.bf16.xpose.msra.mxu0 0
        %621 = vmatprep.subr.bf16.mxu0 0
        %622 = vmatpush1.bf16.xpose.msra.mxu0 0
        %623 = vmatprep.subr.bf16.mxu0 0
        %624 = vmatpush1.bf16.xpose.msra.mxu0 0
        %625 = vmatprep.subr.bf16.mxu0 0
        %626 = vmatpush1.bf16.xpose.msra.mxu0 0
        %627 = vmatprep.subr.bf16.mxu0 0
        %628 = vmatpush1.bf16.xpose.msra.mxu0 0
        %629 = vmatprep.subr.bf16.mxu0 0
        %630 = vmatpush1.bf16.xpose.msra.mxu0 0
        %631 = vmatprep.subr.bf16.mxu0 0
        %632 = vmatpush1.bf16.xpose.msra.mxu0 0
        %633 = vmatprep.subr.bf16.mxu0 0
        %634 = vmatpush1.bf16.xpose.msra.mxu0 0
        %635 = vmatprep.mubr.bf16.mxu0 0
        %636 = vmatmul.mubr.bf16.gmra.mrb[0].mxu0 %v598
        %v637 = vpop.f32.mrb[0].mxu0
        %v638 = vadd.f32 0.0, %v637
        %v639 = vpop.f32.mrb[0].mxu0
        %v640 = vpop.f32.mrb[0].mxu0
        %v641 = vpop.f32.mrb[0].mxu0
        %642 = vdwg.mxu0
        %v643 = vsel %vm596, %v638, -inf
        %644 = vmax.xlane.f32.xlu0 %v643
        %v645 = vpop.xlane.xlu0 %644
        %v646 = vsub.f32 %v638, %v645
        %v647 = vmul.f32 %v646, 1.442695
        %v648 = vpow.pop %v647
        %v649 = vsel %vm596, %v648, 0.0
        %650 = vadd.xlane.f32.xlu0 %v649
        %v651 = vpop.xlane.xlu0 %650
        %v652 = vrcp.pop %v651
        %v653 = vmul.f32 %v648, %v652
        %654 = vst.msk [vmem:[%s500] sm:$0xff] %vm596, %v653
        %v655 = vpack.c.bf16 %v653, %v653
        %656 = vrot.lane.b32.xlu0 %v593, 64
        %v657 = vpop.permute.xlu0 %656
        %v659 = vsel %vm596, %v655, 0
        %vm661 = vcmask 1043456
        %v663 = vsel %vm661, %v657, 0
        %665 = vmatprep.subr.bf16.mxu0 0
        %666 = vmatpush1.bf16.msra.mxu0 %v663
        %667 = vmatprep.subr.bf16.mxu0 0
        %668 = vmatpush1.bf16.msra.mxu0 0
        %669 = vmatprep.subr.bf16.mxu0 0
        %670 = vmatpush1.bf16.msra.mxu0 0
        %671 = vmatprep.subr.bf16.mxu0 0
        %672 = vmatpush1.bf16.msra.mxu0 0
        %673 = vmatprep.subr.bf16.mxu0 0
        %674 = vmatpush1.bf16.msra.mxu0 0
        %675 = vmatprep.subr.bf16.mxu0 0
        %676 = vmatpush1.bf16.msra.mxu0 0
        %677 = vmatprep.subr.bf16.mxu0 0
        %678 = vmatpush1.bf16.msra.mxu0 0
        %679 = vmatprep.subr.bf16.mxu0 0
        %680 = vmatpush1.bf16.msra.mxu0 0
        %681 = vmatprep.subr.bf16.mxu0 0
        %682 = vmatpush1.bf16.msra.mxu0 0
        %683 = vmatprep.subr.bf16.mxu0 0
        %684 = vmatpush1.bf16.msra.mxu0 0
        %685 = vmatprep.subr.bf16.mxu0 0
        %686 = vmatpush1.bf16.msra.mxu0 0
        %687 = vmatprep.subr.bf16.mxu0 0
        %688 = vmatpush1.bf16.msra.mxu0 0
        %689 = vmatprep.subr.bf16.mxu0 0
        %690 = vmatpush1.bf16.msra.mxu0 0
        %691 = vmatprep.subr.bf16.mxu0 0
        %692 = vmatpush1.bf16.msra.mxu0 0
        %693 = vmatprep.subr.bf16.mxu0 0
        %694 = vmatpush1.bf16.msra.mxu0 0
        %695 = vmatprep.subr.bf16.mxu0 0
        %696 = vmatpush1.bf16.msra.mxu0 0
        %697 = vmatprep.mubr.bf16.mxu0 0
        %698 = vmatmul.mubr.bf16.gmra.mrb[0].mxu0 %v659
        %v699 = vpop.f32.mrb[0].mxu0
        %v700 = vadd.f32 0.0, %v699
        %v701 = vpop.f32.mrb[0].mxu0
        %v702 = vpop.f32.mrb[0].mxu0
        %v703 = vpop.f32.mrb[0].mxu0
        %704 = vdwg.mxu0
        %v705 = vpack.c.bf16 %v700, %v700
        %vm706 = vcmask 60416
        %707 = vst.msk [vmem:[#allocation3] sm:$0xf] %vm706, %v705
        %v709 = vunpack.c.l.b16 %v589
        %v710 = vpack.c.b16 %v709, %v709
        %711 = vrot.lane.b32.xlu0 %v710, 120
        %v712 = vpop.permute.xlu0 %711
        %713 = vrot.lane.b32.xlu0 %v593, 88
        %v714 = vpop.permute.xlu0 %713
        %v716 = vsel %vm596, %v712, 0
        %v719 = vsel %vm596, %v714, 0
        %721 = vmatprep.subr.bf16.mxu0 0
        %722 = vmatpush1.bf16.xpose.msra.mxu0 %v719
        %723 = vmatprep.subr.bf16.mxu0 0
        %724 = vmatpush1.bf16.xpose.msra.mxu0 0
        %725 = vmatprep.subr.bf16.mxu0 0
        %726 = vmatpush1.bf16.xpose.msra.mxu0 0
        %727 = vmatprep.subr.bf16.mxu0 0
        %728 = vmatpush1.bf16.xpose.msra.mxu0 0
        %729 = vmatprep.subr.bf16.mxu0 0
        %730 = vmatpush1.bf16.xpose.msra.mxu0 0
        %731 = vmatprep.subr.bf16.mxu0 0
        %732 = vmatpush1.bf16.xpose.msra.mxu0 0
        %733 = vmatprep.subr.bf16.mxu0 0
        %734 = vmatpush1.bf16.xpose.msra.mxu0 0
        %735 = vmatprep.subr.bf16.mxu0 0
        %736 = vmatpush1.bf16.xpose.msra.mxu0 0
        %737 = vmatprep.subr.bf16.mxu0 0
        %738 = vmatpush1.bf16.xpose.msra.mxu0 0
        %739 = vmatprep.subr.bf16.mxu0 0
        %740 = vmatpush1.bf16.xpose.msra.mxu0 0
        %741 = vmatprep.subr.bf16.mxu0 0
        %742 = vmatpush1.bf16.xpose.msra.mxu0 0
        %743 = vmatprep.subr.bf16.mxu0 0
        %744 = vmatpush1.bf16.xpose.msra.mxu0 0
        %745 = vmatprep.subr.bf16.mxu0 0
        %746 = vmatpush1.bf16.xpose.msra.mxu0 0
        %747 = vmatprep.subr.bf16.mxu0 0
        %748 = vmatpush1.bf16.xpose.msra.mxu0 0
        %749 = vmatprep.subr.bf16.mxu0 0
        %750 = vmatpush1.bf16.xpose.msra.mxu0 0
        %751 = vmatprep.subr.bf16.mxu0 0
        %752 = vmatpush1.bf16.xpose.msra.mxu0 0
        %753 = vmatprep.mubr.bf16.mxu0 0
        %754 = vmatmul.mubr.bf16.gmra.mrb[0].mxu0 %v716
        %v755 = vpop.f32.mrb[0].mxu0
        %v756 = vadd.f32 0.0, %v755
        %v757 = vpop.f32.mrb[0].mxu0
        %v758 = vpop.f32.mrb[0].mxu0
        %v759 = vpop.f32.mrb[0].mxu0
        %760 = vdwg.mxu0
        %v761 = vsel %vm596, %v756, -inf
        %762 = vmax.xlane.f32.xlu0 %v761
        %v763 = vpop.xlane.xlu0 %762
        %v764 = vsub.f32 %v756, %v763
        %v765 = vmul.f32 %v764, 1.442695
        %v766 = vpow.pop %v765
        %v767 = vsel %vm596, %v766, 0.0
        %768 = vadd.xlane.f32.xlu0 %v767
        %v769 = vpop.xlane.xlu0 %768
        %v770 = vrcp.pop %v769
        %v771 = vmul.f32 %v766, %v770
        %s772 = scalar_lea.vmem %s500, 8 [#allocation8]
        %773 = vst.msk [vmem:[%s772] sm:$0xff] %vm596, %v771
        %v774 = vpack.c.bf16 %v771, %v771
        %775 = vrot.lane.b32.xlu0 %v593, 56
        %v776 = vpop.permute.xlu0 %775
        %v778 = vsel %vm596, %v774, 0
        %v781 = vsel %vm661, %v776, 0
        %783 = vmatprep.subr.bf16.mxu0 0
        %784 = vmatpush1.bf16.msra.mxu0 %v781
        %785 = vmatprep.subr.bf16.mxu0 0
        %786 = vmatpush1.bf16.msra.mxu0 0
        %787 = vmatprep.subr.bf16.mxu0 0
        %788 = vmatpush1.bf16.msra.mxu0 0
        %789 = vmatprep.subr.bf16.mxu0 0
        %790 = vmatpush1.bf16.msra.mxu0 0
        %791 = vmatprep.subr.bf16.mxu0 0
        %792 = vmatpush1.bf16.msra.mxu0 0
        %793 = vmatprep.subr.bf16.mxu0 0
        %794 = vmatpush1.bf16.msra.mxu0 0
        %795 = vmatprep.subr.bf16.mxu0 0
        %796 = vmatpush1.bf16.msra.mxu0 0
        %797 = vmatprep.subr.bf16.mxu0 0
        %798 = vmatpush1.bf16.msra.mxu0 0
        %799 = vmatprep.subr.bf16.mxu0 0
        %800 = vmatpush1.bf16.msra.mxu0 0
        %801 = vmatprep.subr.bf16.mxu0 0
        %802 = vmatpush1.bf16.msra.mxu0 0
        %803 = vmatprep.subr.bf16.mxu0 0
        %804 = vmatpush1.bf16.msra.mxu0 0
        %805 = vmatprep.subr.bf16.mxu0 0
        %806 = vmatpush1.bf16.msra.mxu0 0
        %807 = vmatprep.subr.bf16.mxu0 0
        %808 = vmatpush1.bf16.msra.mxu0 0
        %809 = vmatprep.subr.bf16.mxu0 0
        %810 = vmatpush1.bf16.msra.mxu0 0
        %811 = vmatprep.subr.bf16.mxu0 0
        %812 = vmatpush1.bf16.msra.mxu0 0
        %813 = vmatprep.subr.bf16.mxu0 0
        %814 = vmatpush1.bf16.msra.mxu0 0
        %815 = vmatprep.mubr.bf16.mxu0 0
        %816 = vmatmul.mubr.bf16.gmra.mrb[0].mxu0 %v778
        %v817 = vpop.f32.mrb[0].mxu0
        %v818 = vadd.f32 0.0, %v817
        %v819 = vpop.f32.mrb[0].mxu0
        %v820 = vpop.f32.mrb[0].mxu0
        %v821 = vpop.f32.mrb[0].mxu0
        %822 = vdwg.mxu0
        %v823 = vpack.c.bf16 %v818, %v818
        %v825 = vunpack.c.l.b16 %v823
        %v826 = vpack.c.b16 %v825, %v825
        %827 = vrot.lane.b32.xlu0 %v826, 8
        %v828 = vpop.permute.xlu0 %827
        %vm830 = vcmask 126016
        %831 = vst.msk [vmem:[#allocation3] sm:$0xf] %vm830, %v828
        %832 = vrot.lane.b32.xlu0 %v710, 112
        %v833 = vpop.permute.xlu0 %832
        %834 = vrot.lane.b32.xlu0 %v593, 80
        %v835 = vpop.permute.xlu0 %834
        %v837 = vsel %vm596, %v833, 0
        %v840 = vsel %vm596, %v835, 0
        %842 = vmatprep.subr.bf16.mxu0 0
        %843 = vmatpush1.bf16.xpose.msra.mxu0 %v840
        %844 = vmatprep.subr.bf16.mxu0 0
        %845 = vmatpush1.bf16.xpose.msra.mxu0 0
        %846 = vmatprep.subr.bf16.mxu0 0
        %847 = vmatpush1.bf16.xpose.msra.mxu0 0
        %848 = vmatprep.subr.bf16.mxu0 0
        %849 = vmatpush1.bf16.xpose.msra.mxu0 0
        %850 = vmatprep.subr.bf16.mxu0 0
        %851 = vmatpush1.bf16.xpose.msra.mxu0 0
        %852 = vmatprep.subr.bf16.mxu0 0
        %853 = vmatpush1.bf16.xpose.msra.mxu0 0
        %854 = vmatprep.subr.bf16.mxu0 0
        %855 = vmatpush1.bf16.xpose.msra.mxu0 0
        %856 = vmatprep.subr.bf16.mxu0 0
        %857 = vmatpush1.bf16.xpose.msra.mxu0 0
        %858 = vmatprep.subr.bf16.mxu0 0
        %859 = vmatpush1.bf16.xpose.msra.mxu0 0
        %860 = vmatprep.subr.bf16.mxu0 0
        %861 = vmatpush1.bf16.xpose.msra.mxu0 0
        %862 = vmatprep.subr.bf16.mxu0 0
        %863 = vmatpush1.bf16.xpose.msra.mxu0 0
        %864 = vmatprep.subr.bf16.mxu0 0
        %865 = vmatpush1.bf16.xpose.msra.mxu0 0
        %866 = vmatprep.subr.bf16.mxu0 0
        %867 = vmatpush1.bf16.xpose.msra.mxu0 0
        %868 = vmatprep.subr.bf16.mxu0 0
        %869 = vmatpush1.bf16.xpose.msra.mxu0 0
        %870 = vmatprep.subr.bf16.mxu0 0
        %871 = vmatpush1.bf16.xpose.msra.mxu0 0
        %872 = vmatprep.subr.bf16.mxu0 0
        %873 = vmatpush1.bf16.xpose.msra.mxu0 0
        %874 = vmatprep.mubr.bf16.mxu0 0
        %875 = vmatmul.mubr.bf16.gmra.mrb[0].mxu0 %v837
        %v876 = vpop.f32.mrb[0].mxu0
        %v877 = vadd.f32 0.0, %v876
        %v878 = vpop.f32.mrb[0].mxu0
        %v879 = vpop.f32.mrb[0].mxu0
        %v880 = vpop.f32.mrb[0].mxu0
        %881 = vdwg.mxu0
        %v882 = vsel %vm596, %v877, -inf
        %883 = vmax.xlane.f32.xlu0 %v882
        %v884 = vpop.xlane.xlu0 %883
        %v885 = vsub.f32 %v877, %v884
        %v886 = vmul.f32 %v885, 1.442695
        %v887 = vpow.pop %v886
        %v888 = vsel %vm596, %v887, 0.0
        %889 = vadd.xlane.f32.xlu0 %v888
        %v890 = vpop.xlane.xlu0 %889
        %v891 = vrcp.pop %v890
        %v892 = vmul.f32 %v887, %v891
        %s893 = scalar_lea.vmem %s500, 16 [#allocation8]
        %894 = vst.msk [vmem:[%s893] sm:$0xff] %vm596, %v892
        %v895 = vpack.c.bf16 %v892, %v892
        %896 = vrot.lane.b32.xlu0 %v593, 48
        %v897 = vpop.permute.xlu0 %896
        %v899 = vsel %vm596, %v895, 0
        %v902 = vsel %vm661, %v897, 0
        %904 = vmatprep.subr.bf16.mxu0 0
        %905 = vmatpush1.bf16.msra.mxu0 %v902
        %906 = vmatprep.subr.bf16.mxu0 0
        %907 = vmatpush1.bf16.msra.mxu0 0
        %908 = vmatprep.subr.bf16.mxu0 0
        %909 = vmatpush1.bf16.msra.mxu0 0
        %910 = vmatprep.subr.bf16.mxu0 0
        %911 = vmatpush1.bf16.msra.mxu0 0
        %912 = vmatprep.subr.bf16.mxu0 0
        %913 = vmatpush1.bf16.msra.mxu0 0
        %914 = vmatprep.subr.bf16.mxu0 0
        %915 = vmatpush1.bf16.msra.mxu0 0
        %916 = vmatprep.subr.bf16.mxu0 0
        %917 = vmatpush1.bf16.msra.mxu0 0
        %918 = vmatprep.subr.bf16.mxu0 0
        %919 = vmatpush1.bf16.msra.mxu0 0
        %920 = vmatprep.subr.bf16.mxu0 0
        %921 = vmatpush1.bf16.msra.mxu0 0
        %922 = vmatprep.subr.bf16.mxu0 0
        %923 = vmatpush1.bf16.msra.mxu0 0
        %924 = vmatprep.subr.bf16.mxu0 0
        %925 = vmatpush1.bf16.msra.mxu0 0
        %926 = vmatprep.subr.bf16.mxu0 0
        %927 = vmatpush1.bf16.msra.mxu0 0
        %928 = vmatprep.subr.bf16.mxu0 0
        %929 = vmatpush1.bf16.msra.mxu0 0
        %930 = vmatprep.subr.bf16.mxu0 0
        %931 = vmatpush1.bf16.msra.mxu0 0
        %932 = vmatprep.subr.bf16.mxu0 0
        %933 = vmatpush1.bf16.msra.mxu0 0
        %934 = vmatprep.subr.bf16.mxu0 0
        %935 = vmatpush1.bf16.msra.mxu0 0
        %936 = vmatprep.mubr.bf16.mxu0 0
        %937 = vmatmul.mubr.bf16.gmra.mrb[0].mxu0 %v899
        %v938 = vpop.f32.mrb[0].mxu0
        %v939 = vadd.f32 0.0, %v938
        %v940 = vpop.f32.mrb[0].mxu0
        %v941 = vpop.f32.mrb[0].mxu0
        %v942 = vpop.f32.mrb[0].mxu0
        %943 = vdwg.mxu0
        %v944 = vpack.c.bf16 %v939, %v939
        %v946 = vunpack.c.l.b16 %v944
        %v947 = vpack.c.b16 %v946, %v946
        %948 = vrot.lane.b32.xlu0 %v947, 16
        %v949 = vpop.permute.xlu0 %948
        %vm951 = vcmask 191616
        %952 = vst.msk [vmem:[#allocation3] sm:$0xf] %vm951, %v949
        %953 = vrot.lane.b32.xlu0 %v710, 104
        %v954 = vpop.permute.xlu0 %953
        %955 = vrot.lane.b32.xlu0 %v593, 72
        %v956 = vpop.permute.xlu0 %955
        %v958 = vsel %vm596, %v954, 0
        %v961 = vsel %vm596, %v956, 0
        %963 = vmatprep.subr.bf16.mxu0 0
        %964 = vmatpush1.bf16.xpose.msra.mxu0 %v961
        %965 = vmatprep.subr.bf16.mxu0 0
        %966 = vmatpush1.bf16.xpose.msra.mxu0 0
        %967 = vmatprep.subr.bf16.mxu0 0
        %968 = vmatpush1.bf16.xpose.msra.mxu0 0
        %969 = vmatprep.subr.bf16.mxu0 0
        %970 = vmatpush1.bf16.xpose.msra.mxu0 0
        %971 = vmatprep.subr.bf16.mxu0 0
        %972 = vmatpush1.bf16.xpose.msra.mxu0 0
        %973 = vmatprep.subr.bf16.mxu0 0
        %974 = vmatpush1.bf16.xpose.msra.mxu0 0
        %975 = vmatprep.subr.bf16.mxu0 0
        %976 = vmatpush1.bf16.xpose.msra.mxu0 0
        %977 = vmatprep.subr.bf16.mxu0 0
        %978 = vmatpush1.bf16.xpose.msra.mxu0 0
        %979 = vmatprep.subr.bf16.mxu0 0
        %980 = vmatpush1.bf16.xpose.msra.mxu0 0
        %981 = vmatprep.subr.bf16.mxu0 0
        %982 = vmatpush1.bf16.xpose.msra.mxu0 0
        %983 = vmatprep.subr.bf16.mxu0 0
        %984 = vmatpush1.bf16.xpose.msra.mxu0 0
        %985 = vmatprep.subr.bf16.mxu0 0
        %986 = vmatpush1.bf16.xpose.msra.mxu0 0
        %987 = vmatprep.subr.bf16.mxu0 0
        %988 = vmatpush1.bf16.xpose.msra.mxu0 0
        %989 = vmatprep.subr.bf16.mxu0 0
        %990 = vmatpush1.bf16.xpose.msra.mxu0 0
        %991 = vmatprep.subr.bf16.mxu0 0
        %992 = vmatpush1.bf16.xpose.msra.mxu0 0
        %993 = vmatprep.subr.bf16.mxu0 0
        %994 = vmatpush1.bf16.xpose.msra.mxu0 0
        %995 = vmatprep.mubr.bf16.mxu0 0
        %996 = vmatmul.mubr.bf16.gmra.mrb[0].mxu0 %v958
        %v997 = vpop.f32.mrb[0].mxu0
        %v998 = vadd.f32 0.0, %v997
        %v999 = vpop.f32.mrb[0].mxu0
        %v1000 = vpop.f32.mrb[0].mxu0
        %v1001 = vpop.f32.mrb[0].mxu0
        %1002 = vdwg.mxu0
        %v1003 = vsel %vm596, %v998, -inf
        %1004 = vmax.xlane.f32.xlu0 %v1003
        %v1005 = vpop.xlane.xlu0 %1004
        %v1006 = vsub.f32 %v998, %v1005
        %v1007 = vmul.f32 %v1006, 1.442695
        %v1008 = vpow.pop %v1007
        %v1009 = vsel %vm596, %v1008, 0.0
        %1010 = vadd.xlane.f32.xlu0 %v1009
        %v1011 = vpop.xlane.xlu0 %1010
        %v1012 = vrcp.pop %v1011
        %v1013 = vmul.f32 %v1008, %v1012
        %s1014 = scalar_lea.vmem %s500, 24 [#allocation8]
        %1015 = vst.msk [vmem:[%s1014] sm:$0xff] %vm596, %v1013
        %v1016 = vpack.c.bf16 %v1013, %v1013
        %1017 = vrot.lane.b32.xlu0 %v593, 40
        %v1018 = vpop.permute.xlu0 %1017
        %v1020 = vsel %vm596, %v1016, 0
        %v1023 = vsel %vm661, %v1018, 0
        %1025 = vmatprep.subr.bf16.mxu0 0
        %1026 = vmatpush1.bf16.msra.mxu0 %v1023
        %1027 = vmatprep.subr.bf16.mxu0 0
        %1028 = vmatpush1.bf16.msra.mxu0 0
        %1029 = vmatprep.subr.bf16.mxu0 0
        %1030 = vmatpush1.bf16.msra.mxu0 0
        %1031 = vmatprep.subr.bf16.mxu0 0
        %1032 = vmatpush1.bf16.msra.mxu0 0
        %1033 = vmatprep.subr.bf16.mxu0 0
        %1034 = vmatpush1.bf16.msra.mxu0 0
        %1035 = vmatprep.subr.bf16.mxu0 0
        %1036 = vmatpush1.bf16.msra.mxu0 0
        %1037 = vmatprep.subr.bf16.mxu0 0
        %1038 = vmatpush1.bf16.msra.mxu0 0
        %1039 = vmatprep.subr.bf16.mxu0 0
        %1040 = vmatpush1.bf16.msra.mxu0 0
        %1041 = vmatprep.subr.bf16.mxu0 0
        %1042 = vmatpush1.bf16.msra.mxu0 0
        %1043 = vmatprep.subr.bf16.mxu0 0
        %1044 = vmatpush1.bf16.msra.mxu0 0
        %1045 = vmatprep.subr.bf16.mxu0 0
        %1046 = vmatpush1.bf16.msra.mxu0 0
        %1047 = vmatprep.subr.bf16.mxu0 0
        %1048 = vmatpush1.bf16.msra.mxu0 0
        %1049 = vmatprep.subr.bf16.mxu0 0
        %1050 = vmatpush1.bf16.msra.mxu0 0
        %1051 = vmatprep.subr.bf16.mxu0 0
        %1052 = vmatpush1.bf16.msra.mxu0 0
        %1053 = vmatprep.subr.bf16.mxu0 0
        %1054 = vmatpush1.bf16.msra.mxu0 0
        %1055 = vmatprep.subr.bf16.mxu0 0
        %1056 = vmatpush1.bf16.msra.mxu0 0
        %1057 = vmatprep.mubr.bf16.mxu0 0
        %1058 = vmatmul.mubr.bf16.gmra.mrb[0].mxu0 %v1020
        %v1059 = vpop.f32.mrb[0].mxu0
        %v1060 = vadd.f32 0.0, %v1059
        %v1061 = vpop.f32.mrb[0].mxu0
        %v1062 = vpop.f32.mrb[0].mxu0
        %v1063 = vpop.f32.mrb[0].mxu0
        %1064 = vdwg.mxu0
        %v1065 = vpack.c.bf16 %v1060, %v1060
        %v1067 = vunpack.c.l.b16 %v1065
        %v1068 = vpack.c.b16 %v1067, %v1067
        %1069 = vrot.lane.b32.xlu0 %v1068, 24
        %v1070 = vpop.permute.xlu0 %1069
        %vm1072 = vcmask 257216
        %1073 = vst.msk [vmem:[#allocation3] sm:$0xf] %vm1072, %v1070
        %v1074 = vld [vmem:[#allocation3] sm:$0xf]
        %v1075 = vld [vmem:[%s3] sm:$0xf]
        %v1076 = vld [vmem:[%s3 + $0x4] sm:$0xf]
        %v1077 = vld [vmem:[%s3 + $0x8] sm:$0xf]
        %v1078 = vld [vmem:[%s3 + $0xc] sm:$0xf]
        %v1079 = vld [vmem:[%s4] sm:$0x1]
        %v1081 = vlaneseq
        %v1082 = vshrl.u32 %v1081, 7
        %v1083 = vsub.s32 0, %v1082
        %v1084 = vrot.slane %v1079, %v1083
        %v1090 = vunpack.c.l.b16 %v1075
        %v1091 = vunpack.c.l.b16 %v1076
        %v1092 = vunpack.c.l.b16 %v1077
        %v1093 = vunpack.c.l.b16 %v1078
        %v1094 = vpack.c.b16 %v1091, %v1090
        %v1095 = vpack.c.b16 %v1093, %v1092
        %vm1098 = vcmask 261120
        %v1100 = vsel %vm1098, %v1074, 0
        %1102 = vmatprep.subr.bf16.mxu0 0
        %1103 = vmatpush1.bf16.msra.mxu0 %v1094
        %1104 = vmatprep.subr.bf16.mxu0 0
        %1105 = vmatpush1.bf16.msra.mxu0 %v1095
        %1106 = vmatprep.subr.bf16.mxu0 0
        %1107 = vmatpush1.bf16.msra.mxu0 0
        %1108 = vmatprep.subr.bf16.mxu0 0
        %1109 = vmatpush1.bf16.msra.mxu0 0
        %1110 = vmatprep.subr.bf16.mxu0 0
        %1111 = vmatpush1.bf16.msra.mxu0 0
        %1112 = vmatprep.subr.bf16.mxu0 0
        %1113 = vmatpush1.bf16.msra.mxu0 0
        %1114 = vmatprep.subr.bf16.mxu0 0
        %1115 = vmatpush1.bf16.msra.mxu0 0
        %1116 = vmatprep.subr.bf16.mxu0 0
        %1117 = vmatpush1.bf16.msra.mxu0 0
        %1118 = vmatprep.subr.bf16.mxu0 0
        %1119 = vmatpush1.bf16.msra.mxu0 0
        %1120 = vmatprep.subr.bf16.mxu0 0
        %1121 = vmatpush1.bf16.msra.mxu0 0
        %1122 = vmatprep.subr.bf16.mxu0 0
        %1123 = vmatpush1.bf16.msra.mxu0 0
        %1124 = vmatprep.subr.bf16.mxu0 0
        %1125 = vmatpush1.bf16.msra.mxu0 0
        %1126 = vmatprep.subr.bf16.mxu0 0
        %1127 = vmatpush1.bf16.msra.mxu0 0
        %1128 = vmatprep.subr.bf16.mxu0 0
        %1129 = vmatpush1.bf16.msra.mxu0 0
        %1130 = vmatprep.subr.bf16.mxu0 0
        %1131 = vmatpush1.bf16.msra.mxu0 0
        %1132 = vmatprep.subr.bf16.mxu0 0
        %1133 = vmatpush1.bf16.msra.mxu0 0
        %1134 = vmatprep.mubr.bf16.mxu0 0
        %1135 = vmatmul.mubr.bf16.gmra.mrb[0].mxu0 %v1100
        %v1136 = vpop.f32.mrb[0].mxu0
        %v1137 = vadd.f32 %v1084, %v1136
        %v1138 = vpop.f32.mrb[0].mxu0
        %v1139 = vpop.f32.mrb[0].mxu0
        %v1140 = vpop.f32.mrb[0].mxu0
        %1141 = vdwg.mxu0
        %v1142 = vadd.f32 %v584, %v1137
        %v1143 = vld [vmem:[%s9] sm:$0x1]
        %v1144 = vld [vmem:[%s10] sm:$0x1]
        %v1145 = vsel %vm1098, %v1142, 0.0
        %1146 = vadd.xlane.f32.xlu0 %v1145
        %v1147 = vpop.xlane.xlu0 %1146
        %v1148 = vrcp.pop 32.0
        %v1149 = vmul.f32 %v1147, %v1148
        %v1150 = vsub.f32 %v1142, %v1149
        %v1151 = vmul.f32 %v1150, %v1150
        %v1152 = vsel %vm1098, %v1151, 0.0
        %1153 = vadd.xlane.f32.xlu0 %v1152
        %v1154 = vpop.xlane.xlu0 %1153
        %v1155 = vmul.f32 %v1154, %v1148
        %v1156 = vadd.f32 %v1155, 1e-05
        %v1157 = vrsqrt.pop %v1156
        %v1158 = vmul.f32 %v1150, %v1157
        %v1160 = vlaneseq
        %v1161 = vshrl.u32 %v1160, 7
        %v1162 = vsub.s32 0, %v1161
        %v1163 = vrot.slane %v1143, %v1162
        %v1165 = vmul.f32 %v1158, %v1163
        %v1167 = vlaneseq
        %v1168 = vshrl.u32 %v1167, 7
        %v1169 = vsub.s32 0, %v1168
        %v1170 = vrot.slane %v1144, %v1169
        %v1172 = vadd.f32 %v1165, %v1170
        %v1173 = vpack.c.bf16 %v1172, %v1172
        %v1174 = vld [vmem:[#allocation4] sm:$0xf]
        %v1175 = vld [vmem:[#allocation4 + $0x4] sm:$0xf]
        %v1176 = vld [vmem:[#allocation4 + $0x8] sm:$0xf]
        %v1177 = vld [vmem:[#allocation4 + $0xc] sm:$0xf]
        %v1178 = vld [vmem:[%s6] sm:$0x1]
        %v1180 = vlaneseq
        %v1181 = vshrl.u32 %v1180, 7
        %v1182 = vsub.s32 0, %v1181
        %v1183 = vrot.slane %v1178, %v1182
        %v1189 = vunpack.c.l.b16 %v1174
        %v1190 = vunpack.c.l.b16 %v1175
        %v1191 = vunpack.c.l.b16 %v1176
        %v1192 = vunpack.c.l.b16 %v1177
        %v1193 = vpack.c.b16 %v1190, %v1189
        %v1194 = vpack.c.b16 %v1192, %v1191
        %v1198 = vsel %vm1098, %v1173, 0
        %1200 = vmatprep.subr.bf16.mxu0 0
        %1201 = vmatpush1.bf16.msra.mxu0 %v1193
        %1202 = vmatprep.subr.bf16.mxu0 0
        %1203 = vmatpush1.bf16.msra.mxu0 %v1194
        %1204 = vmatprep.subr.bf16.mxu0 0
        %1205 = vmatpush1.bf16.msra.mxu0 0
        %1206 = vmatprep.subr.bf16.mxu0 0
        %1207 = vmatpush1.bf16.msra.mxu0 0
        %1208 = vmatprep.subr.bf16.mxu0 0
        %1209 = vmatpush1.bf16.msra.mxu0 0
        %1210 = vmatprep.subr.bf16.mxu0 0
        %1211 = vmatpush1.bf16.msra.mxu0 0
        %1212 = vmatprep.subr.bf16.mxu0 0
        %1213 = vmatpush1.bf16.msra.mxu0 0
        %1214 = vmatprep.subr.bf16.mxu0 0
        %1215 = vmatpush1.bf16.msra.mxu0 0
        %1216 = vmatprep.subr.bf16.mxu0 0
        %1217 = vmatpush1.bf16.msra.mxu0 0
        %1218 = vmatprep.subr.bf16.mxu0 0
        %1219 = vmatpush1.bf16.msra.mxu0 0
        %1220 = vmatprep.subr.bf16.mxu0 0
        %1221 = vmatpush1.bf16.msra.mxu0 0
        %1222 = vmatprep.subr.bf16.mxu0 0
        %1223 = vmatpush1.bf16.msra.mxu0 0
        %1224 = vmatprep.subr.bf16.mxu0 0
        %1225 = vmatpush1.bf16.msra.mxu0 0
        %1226 = vmatprep.subr.bf16.mxu0 0
        %1227 = vmatpush1.bf16.msra.mxu0 0
        %1228 = vmatprep.subr.bf16.mxu0 0
        %1229 = vmatpush1.bf16.msra.mxu0 0
        %1230 = vmatprep.subr.bf16.mxu0 0
        %1231 = vmatpush1.bf16.msra.mxu0 0
        %1232 = vmatprep.mubr.bf16.mxu0 0
        %1233 = vmatmul.mubr.bf16.gmra.mrb[0].mxu0 %v1198
        %v1234 = vpop.f32.mrb[0].mxu0
        %v1235 = vadd.f32 %v1183, %v1234
        %v1236 = vpop.f32.mrb[0].mxu0
        %v1237 = vpop.f32.mrb[0].mxu0
        %v1238 = vpop.f32.mrb[0].mxu0
        %1239 = vdwg.mxu0
        %v1240 = vmax.f32 %v1235, 0.0
        %v1241 = vpack.c.bf16 %v1240, %v1240
        %v1242 = vld [vmem:[%s7] sm:$0xf]
        %v1243 = vld [vmem:[%s7 + $0x4] sm:$0xf]
        %v1244 = vld [vmem:[%s7 + $0x8] sm:$0xf]
        %v1245 = vld [vmem:[%s7 + $0xc] sm:$0xf]
        %v1246 = vld [vmem:[%s7 + $0x10] sm:$0xf]
        %v1247 = vld [vmem:[%s7 + $0x14] sm:$0xf]
        %v1248 = vld [vmem:[%s7 + $0x18] sm:$0xf]
        %v1249 = vld [vmem:[%s7 + $0x1c] sm:$0xf]
        %v1250 = vld [vmem:[%s8] sm:$0x1]
        %v1252 = vlaneseq
        %v1253 = vshrl.u32 %v1252, 7
        %v1254 = vsub.s32 0, %v1253
        %v1255 = vrot.slane %v1250, %v1254
        %v1265 = vunpack.c.l.b16 %v1242
        %v1266 = vunpack.c.l.b16 %v1243
        %v1267 = vunpack.c.l.b16 %v1244
        %v1268 = vunpack.c.l.b16 %v1245
        %v1269 = vunpack.c.l.b16 %v1246
        %v1270 = vunpack.c.l.b16 %v1247
        %v1271 = vunpack.c.l.b16 %v1248
        %v1272 = vunpack.c.l.b16 %v1249
        %v1273 = vpack.c.b16 %v1266, %v1265
        %v1274 = vpack.c.b16 %v1268, %v1267
        %v1275 = vpack.c.b16 %v1270, %v1269
        %v1276 = vpack.c.b16 %v1272, %v1271
        %vm1281 = vcmask 523264
        %v1283 = vsel %vm1281, %v1241, 0
        %1285 = vmatprep.subr.bf16.mxu0 0
        %1286 = vmatpush1.bf16.msra.mxu0 %v1273
        %1287 = vmatprep.subr.bf16.mxu0 0
        %1288 = vmatpush1.bf16.msra.mxu0 %v1274
        %1289 = vmatprep.subr.bf16.mxu0 0
        %1290 = vmatpush1.bf16.msra.mxu0 %v1275
        %1291 = vmatprep.subr.bf16.mxu0 0
        %1292 = vmatpush1.bf16.msra.mxu0 %v1276
        %1293 = vmatprep.subr.bf16.mxu0 0
        %1294 = vmatpush1.bf16.msra.mxu0 0
        %1295 = vmatprep.subr.bf16.mxu0 0
        %1296 = vmatpush1.bf16.msra.mxu0 0
        %1297 = vmatprep.subr.bf16.mxu0 0
        %1298 = vmatpush1.bf16.msra.mxu0 0
        %1299 = vmatprep.subr.bf16.mxu0 0
        %1300 = vmatpush1.bf16.msra.mxu0 0
        %1301 = vmatprep.subr.bf16.mxu0 0
        %1302 = vmatpush1.bf16.msra.mxu0 0
        %1303 = vmatprep.subr.bf16.mxu0 0
        %1304 = vmatpush1.bf16.msra.mxu0 0
        %1305 = vmatprep.subr.bf16.mxu0 0
        %1306 = vmatpush1.bf16.msra.mxu0 0
        %1307 = vmatprep.subr.bf16.mxu0 0
        %1308 = vmatpush1.bf16.msra.mxu0 0
        %1309 = vmatprep.subr.bf16.mxu0 0
        %1310 = vmatpush1.bf16.msra.mxu0 0
        %1311 = vmatprep.subr.bf16.mxu0 0
        %1312 = vmatpush1.bf16.msra.mxu0 0
        %1313 = vmatprep.subr.bf16.mxu0 0
        %1314 = vmatpush1.bf16.msra.mxu0 0
        %1315 = vmatprep.subr.bf16.mxu0 0
        %1316 = vmatpush1.bf16.msra.mxu0 0
        %1317 = vmatprep.mubr.bf16.mxu0 0
        %1318 = vmatmul.mubr.bf16.gmra.mrb[0].mxu0 %v1283
        %v1319 = vpop.f32.mrb[0].mxu0
        %v1320 = vadd.f32 %v1255, %v1319
        %v1321 = vpop.f32.mrb[0].mxu0
        %v1322 = vpop.f32.mrb[0].mxu0
        %v1323 = vpop.f32.mrb[0].mxu0
        %1324 = vdwg.mxu0
        %v1325 = vadd.f32 %v1172, %v1320
        %v1326 = vld [vmem:[%s11] sm:$0x1]
        %v1327 = vld [vmem:[%s12] sm:$0x1]
        %v1328 = vsel %vm1098, %v1325, 0.0
        %1329 = vadd.xlane.f32.xlu0 %v1328
        %v1330 = vpop.xlane.xlu0 %1329
        %v1331 = vmul.f32 %v1330, %v1148
        %v1332 = vsub.f32 %v1325, %v1331
        %v1333 = vmul.f32 %v1332, %v1332
        %v1334 = vsel %vm1098, %v1333, 0.0
        %1335 = vadd.xlane.f32.xlu0 %v1334
        %v1336 = vpop.xlane.xlu0 %1335
        %v1337 = vmul.f32 %v1336, %v1148
        %v1338 = vadd.f32 %v1337, 1e-05
        %v1339 = vrsqrt.pop %v1338
        %v1340 = vmul.f32 %v1332, %v1339
        %v1342 = vlaneseq
        %v1343 = vshrl.u32 %v1342, 7
        %v1344 = vsub.s32 0, %v1343
        %v1345 = vrot.slane %v1326, %v1344
        %v1347 = vmul.f32 %v1340, %v1345
        %v1349 = vlaneseq
        %v1350 = vshrl.u32 %v1349, 7
        %v1351 = vsub.s32 0, %v1350
        %v1352 = vrot.slane %v1327, %v1351
        %v1354 = vadd.f32 %v1347, %v1352
        %1355 = vst.msk [vmem:[%s493] sm:$0xff] %vm1098, %v1354
        %s1356 = sand.u32 %s333, 1
        %s1357 = scalar_lea.sflag [#allocation6], %s1356
        %s1358 = sand.u32 %s333, 1
        %s1359 = smul.addr %s1358, 8
        %s1360 = scalar_lea.vmem [#allocation7], %s1359
        %s1361 = sand.u32 %s361, 1
        %s1362 = scalar_lea.sflag [#allocation9], %s1361
        %s1363 = sand.u32 %s361, 1
        %s1364 = smul.addr %s1363, 32
        %s1365 = scalar_lea.vmem [#allocation8], %s1364
        // Predicated region
        $region81: #{tpu_custom_call.1} parent=71 // pred_check
          %p1366 = pneg %p343
        $region82: #{tpu_custom_call.1} parent=71 // pred_check_branch
          %1368 = sbr.rel (%p1366) target = $region84
        $region83: #{tpu_custom_call.1} parent=71 // pred_region
          %s1370 = ssub.s32 128, 128
          %1371 = vsyncadd %s1357, %s1370
          %s1372 = sadd.s32 %s38, %s37
          %s1373 = smul.addr %s1372, 128
          %s1374 = scalar_lea.hbm %s13, %s1373
          %s1376 = sshll.u32 %s1360, 4
          %s1377 = int_to_ptr.vmem [resolvable:$true] %s1376
          %1379 = dma.vmem_to_hbm [thread:$0]  %s1377, 128, %s1374, %s1357
        $region84: #{tpu_custom_call.1} parent=71 // pred_fallthru
          _
        // Predicated region
        $region85: #{tpu_custom_call.1} parent=71 // pred_check
          %p1380 = pneg %p371
        $region86: #{tpu_custom_call.1} parent=71 // pred_check_branch
          %1382 = sbr.rel (%p1380) target = $region88
        $region87: #{tpu_custom_call.1} parent=71 // pred_region
          %s1384 = ssub.s32 512, 512
          %1385 = vsyncadd %s1362, %s1384
          %s1386 = smul.addr %s37, 4
          %s1387 = sadd.s32 %s38, %s1386
          %s1388 = smul.addr %s1387, 128
          %s1389 = scalar_lea.hbm %s14, %s1388
          %s1390 = sshll.u32 %s1365, 4
          %s1391 = int_to_ptr.vmem [resolvable:$true] %s1390
          %1396 = dma.vmem_to_hbm [thread:$0]  %s1391, 512, %s1389, %s1362, 128, 128, 8
        $region88: #{tpu_custom_call.1} parent=71 // pred_fallthru
          _
      $region72: #{tpu_custom_call.1} parent=5 // pred_fallthru
        _
      %p1397 = scmp.le.s32.totalorder 2, %s28
      // Predicated region
      $region89: #{tpu_custom_call.1} parent=5 // pred_check
        %p1398 = pneg %p1397
      $region90: #{tpu_custom_call.1} parent=5 // pred_check_branch
        %1400 = sbr.rel (%p1398) target = $region92
      $region91: #{tpu_custom_call.1} parent=5 // pred_region
        %s1401 = ssub.s32 %s28, 2
        // Predicated region
        $region93: #{tpu_custom_call.1} parent=91 // pred_check
          %p1402 = pneg %p349
        $region94: #{tpu_custom_call.1} parent=91 // pred_check_branch
          %1404 = sbr.rel (%p1402) target = $region96
        $region95: #{tpu_custom_call.1} parent=91 // pred_region
          %s1405 = sand.u32 %s334, 1
          %s1406 = scalar_lea.sflag [#allocation6], %s1405
          %s1407 = sand.u32 %s334, 1
          %s1408 = smul.addr %s1407, 8
          %s1409 = scalar_lea.vmem [#allocation7], %s1408
          %1410 = dma.done %s1406, 128
        $region96: #{tpu_custom_call.1} parent=91 // pred_fallthru
          _
        // Predicated region
        $region97: #{tpu_custom_call.1} parent=91 // pred_check
          %p1411 = pneg %p377
        $region98: #{tpu_custom_call.1} parent=91 // pred_check_branch
          %1413 = sbr.rel (%p1411) target = $region100
        $region99: #{tpu_custom_call.1} parent=91 // pred_region
          %s1414 = sand.u32 %s362, 1
          %s1415 = scalar_lea.sflag [#allocation9], %s1414
          %s1416 = sand.u32 %s362, 1
          %s1417 = smul.addr %s1416, 32
          %s1418 = scalar_lea.vmem [#allocation8], %s1417
          %1419 = dma.done %s1415, 512
        $region100: #{tpu_custom_call.1} parent=91 // pred_fallthru
          _
      $region92: #{tpu_custom_call.1} parent=5 // pred_fallthru
        _
    $region6: #{tpu_custom_call.1} parent=1 // loop_footer
      %s32 = sadd.s32 1, %s28
    $region7: #{tpu_custom_call.1} parent=1 // loop_footer_branch
      %27 = sbr.rel target = $region3
    $region8: #{tpu_custom_call.1} parent=1 // loop_exit
      _
    %1420 = vsyncpa [#allocation5], 1
    %s1421 = scalar_lea.sflag [#allocation5], 1
    %1422 = vsyncpa %s1421, 1
    %1423 = vsyncpa [#allocation6], 1
    %s1424 = scalar_lea.sflag [#allocation6], 1
    %1425 = vsyncpa %s1424, 1
    %1426 = vsyncpa [#allocation9], 1
    %s1427 = scalar_lea.sflag [#allocation9], 1
    %1428 = vsyncpa %s1427, 1

</llo_original>
